<compile_context>
chip_gen: v7x
topology: tpu7x:2x2x1
jax: 0.10.0
libtpu: 0.0.40
codegen_flags: <defaults>
</compile_context>

<pallas_src>
import functools
import math

import jax
import jax.numpy as jnp
from jax import lax
from jax.experimental import pallas as pl
from jax.experimental.pallas import tpu as pltpu


# ------------------------------ Pallas kernel ------------------------------
def _attention_kernel(x_ref, wqkv_ref, bqkv_ref, wdw_ref, bdw_ref,
                      wc2_ref, bc2_ref, dwmask_ref, amask_ref, out_ref,
                      *, num_head, dim_key, dim_head, W):
    C = num_head * dim_head
    nqk = num_head * dim_key

    x = x_ref[...].astype(jnp.bfloat16)                 # (C, B*N), lanes=tokens
    bn = x.shape[1]

    # --- qkv 1x1 conv (+ folded BN, + folded softmax scale on the Q rows) ---
    qkv = jnp.dot(wqkv_ref[...], x,
                  preferred_element_type=jnp.float32) + bqkv_ref[...]

    # rows are [Q_all | K_all | V_all]; head splits are sublane-tile aligned
    q = qkv[:nqk].reshape(num_head, dim_key, bn).astype(jnp.bfloat16)
    k = qkv[nqk:2 * nqk].reshape(num_head, dim_key, bn).astype(jnp.bfloat16)
    v = qkv[2 * nqk:]                                   # (C, B*N), f32 (dw path)
    v_h = v.reshape(num_head, dim_head, bn).astype(jnp.bfloat16)

    # --- multi-head attention over the folded B*N token axis ---------------
    # logits[h, i, j] = sum_d q[h, d, i] * k[h, d, j]   (scale pre-folded)
    logits = lax.dot_general(q, k, (((1,), (1,)), ((0,), (0,))),
                             preferred_element_type=jnp.float32)
    logits = logits + amask_ref[...]                    # block-diag batch mask
    logits = logits - jnp.max(logits, axis=-1, keepdims=True)
    p = jnp.exp(logits)
    p = p * pl.reciprocal(jnp.sum(p, axis=-1, keepdims=True), approx=True)
    # attn[h, d, i] = sum_j v[h, d, j] * p[h, i, j]     (== v @ p^T per head)
    attn = lax.dot_general(v_h, p.astype(jnp.bfloat16),
                           (((2,), (2,)), ((0,), (0,))),
                           preferred_element_type=jnp.float32)
    attn_out = attn.reshape(C, bn)                      # (C, B*N), f32

    # --- depthwise 3x3 conv (+ folded BN) on v: XLU lane rolls + masks -----
    dw = v * wdw_ref[4]                                 # center tap, mask == 1
    for dy in (-1, 0, 1):
        for dx in (-1, 0, 1):
            if dy == 0 and dx == 0:
                continue
            t = (dy + 1) * 3 + (dx + 1)
            shift = (-(dy * W + dx)) % bn               # static, non-negative
            rolled = pltpu.roll(v, shift, axis=1)
            dw = dw + (rolled * dwmask_ref[t]) * wdw_ref[t]
    dw = dw + bdw_ref[...]

    # --- residual add, then final 1x1 conv (+ folded BN) -------------------
    y = (attn_out + dw).astype(jnp.bfloat16)
    out = jnp.dot(wc2_ref[...], y,
                  preferred_element_type=jnp.float32) + bc2_ref[...]
    out_ref[...] = out.astype(out_ref.dtype)


# --------------------------------- wrapper ---------------------------------
def attention_forward(x_nchw, kparams, *, num_head):
    B, C, H, W = x_nchw.shape
    dim_head = C // num_head
    dim_key = dim_head // 2
    N = H * W
    BN = B * N
    wqkv, bqkv, wdw, bdw, wc2, bc2, dwmask, amask = kparams
    c_qkv = wqkv.shape[0]

    # Channel-major slab with the batch folded into the token (lane) axis:
    # (B,C,H,W) -> (C, B*N).  One tiny host transpose buys 128-wide lane-dense
    # stores and full vregs for every VPU/XLU/MXU op in the kernel.
    x_cbn = jnp.transpose(x_nchw.reshape(B, C, N), (1, 0, 2)).reshape(C, BN)

    kernel = functools.partial(_attention_kernel, num_head=num_head,
                               dim_key=dim_key, dim_head=dim_head, W=W)

    def _nbytes(a):
        return int(a.size) * a.dtype.itemsize

    weight_bytes = sum(_nbytes(a) for a in
                       (wqkv, bqkv, wdw, bdw, wc2, bc2, dwmask, amask))
    flops = (2 * c_qkv * C * BN + 2 * C * C * BN
             + 2 * num_head * (dim_key + dim_head) * BN * BN
             + 27 * C * BN)
    cost = pl.CostEstimate(
        flops=int(flops),
        transcendentals=int(num_head * BN * BN),
        bytes_accessed=int(C * BN * 4 + C * BN * 2 + weight_bytes))

    # VMEM: double-buffered x/out blocks + (double-buffered) resident weights
    # + softmax temporaries (logits / p / exp).  Clamped to stay well inside
    # v7x's 64 MiB physical VMEM.
    vmem_need = (2 * (C * BN * 4 + C * BN * 2)
                 + 2 * weight_bytes
                 + 10 * num_head * BN * BN * 4)
    vmem_limit = int(min(max(vmem_need, 16 * 1024 * 1024), 48 * 1024 * 1024))

    out_cbn = pl.pallas_call(
        kernel,
        out_shape=jax.ShapeDtypeStruct((C, BN), jnp.bfloat16),
        grid=(1,),
        in_specs=[
            pl.BlockSpec((C, BN), lambda i: (0, 0)),       # x  (channel-major)
            pl.BlockSpec((c_qkv, C), lambda i: (0, 0)),    # qkv weight (bf16)
            pl.BlockSpec((c_qkv, 1), lambda i: (0, 0)),    # qkv bias (f32)
            pl.BlockSpec((9, C, 1), lambda i: (0, 0, 0)),  # dw taps (f32)
            pl.BlockSpec((C, 1), lambda i: (0, 0)),        # dw bias (f32)
            pl.BlockSpec((C, C), lambda i: (0, 0)),        # conv2 weight (bf16)
            pl.BlockSpec((C, 1), lambda i: (0, 0)),        # conv2 bias (f32)
            pl.BlockSpec((9, 1, BN), lambda i: (0, 0, 0)),  # dw border/batch masks
            pl.BlockSpec((1, BN, BN), lambda i: (0, 0, 0)), # additive attn mask
        ],
        out_specs=pl.BlockSpec((C, BN), lambda i: (0, 0)),
        compiler_params=pltpu.CompilerParams(
            dimension_semantics=("arbitrary",),
            vmem_limit_bytes=vmem_limit),
        cost_estimate=cost,
    )(x_cbn, wqkv, bqkv, wdw, bdw, wc2, bc2, dwmask, amask)

    out = jnp.transpose(out_cbn.reshape(C, B, N), (1, 0, 2)).reshape(B, C, H, W)
    return out


# ----------------------- host-side parameter folding -----------------------
def fold_params_for_kernel(fused, num_head, B, H, W):
    """PyTorch-ordered fused params -> kernel layout (reorder, scale-fold, cast)."""
    Wqkv_f, bqkv_f, Wdw_f, bdw_f, Wc2_f, bc2_f = fused
    c_qkv, C = Wqkv_f.shape
    dim_head = C // num_head
    dim_key = dim_head // 2
    per_head = 2 * dim_key + dim_head
    nqk = num_head * dim_key
    N = H * W

    # row permutation: per-head [q|k|v] blocks -> [Q_all | K_all | V_all]
    base = jnp.arange(num_head) * per_head
    q_rows = (base[:, None] + jnp.arange(dim_key)[None, :]).reshape(-1)
    k_rows = q_rows + dim_key
    v_rows = (base[:, None] + 2 * dim_key
              + jnp.arange(dim_head)[None, :]).reshape(-1)
    perm = jnp.concatenate([q_rows, k_rows, v_rows])

    # fold the softmax scale into the Q rows (zero runtime cost)
    scale = dim_key ** (-0.5)
    row_scale = jnp.where(jnp.arange(c_qkv) < nqk, scale, 1.0).astype(jnp.float32)

    wqkv = (Wqkv_f[perm] * row_scale[:, None]).astype(jnp.bfloat16)   # (c_qkv, C)
    bqkv = (bqkv_f[perm] * row_scale)[:, None].astype(jnp.float32)    # (c_qkv, 1)

    wdw = jnp.transpose(Wdw_f[:, 0].reshape(C, 9), (1, 0))[:, :, None]
    wdw = wdw.astype(jnp.float32)                                     # (9, C, 1)
    bdw = bdw_f[:, None].astype(jnp.float32)                          # (C, 1)
    wc2 = Wc2_f.astype(jnp.bfloat16)                                  # (C, C)
    bc2 = bc2_f[:, None].astype(jnp.float32)                          # (C, 1)

    # depthwise-conv border-validity masks, tiled across the folded batch axis
    # (these also kill every cross-batch contribution of the lane rolls).
    yy = jnp.arange(H)[:, None]
    xx = jnp.arange(W)[None, :]
    masks = []
    for dy in (-1, 0, 1):
        for dx in (-1, 0, 1):
            m = ((yy + dy >= 0) & (yy + dy < H) &
                 (xx + dx >= 0) & (xx + dx < W)).reshape(N)
            masks.append(jnp.tile(m, B)[None, :])                     # (1, B*N)
    dwmask = jnp.stack(masks, axis=0).astype(jnp.float32)             # (9, 1, B*N)

    # additive attention mask: tokens may only attend within their own batch.
    token_b = jnp.repeat(jnp.arange(B), N)
    amask = jnp.where(token_b[:, None] == token_b[None, :], 0.0, -1e9)
    amask = amask.astype(jnp.float32)[None]                           # (1, BN, BN)

    return (wqkv, bqkv, wdw, bdw, wc2, bc2, dwmask, amask)


# ------------------------- parameter construction --------------------------
def _bn_params(key, c):
    k1, k2, k3, k4 = jax.random.split(key, 4)
    gamma = jax.random.uniform(k1, (c,), minval=0.5, maxval=1.5)
    beta = jax.random.normal(k2, (c,)) * 0.1
    mean = jax.random.normal(k3, (c,)) * 0.1
    var = jax.random.uniform(k4, (c,), minval=0.5, maxval=1.5)
    return gamma, beta, mean, var


def make_fused_params(key, ch, num_head, eps=1e-5):
    """Random Conv+BN weights folded to inference form, PyTorch channel order."""
    dim_head = ch // num_head
    dim_key = dim_head // 2
    c_qkv = ch + dim_key * num_head * 2
    k = jax.random.split(key, 6)

    # qkv: Conv2d(ch -> c_qkv, 1x1, bias=False) + BN (folded)
    W_qkv = jax.random.normal(k[0], (c_qkv, ch), jnp.float32) / math.sqrt(ch)
    g, b, m, v = _bn_params(k[1], c_qkv)
    s = g / jnp.sqrt(v + eps)
    Wqkv_f = W_qkv * s[:, None]
    bqkv_f = b - m * s

    # conv1: depthwise Conv2d(ch, 3x3, groups=ch, bias=False) + BN (folded)
    W_dw = jax.random.normal(k[2], (ch, 1, 3, 3), jnp.float32) * 0.1
    g1, b1, m1, v1 = _bn_params(k[3], ch)
    s1 = g1 / jnp.sqrt(v1 + eps)
    Wdw_f = W_dw * s1[:, None, None, None]
    bdw_f = b1 - m1 * s1

    # conv2: Conv2d(ch -> ch, 1x1, bias=False) + BN (folded)
    W_c2 = jax.random.normal(k[4], (ch, ch), jnp.float32) / math.sqrt(ch)
    g2, b2, m2, v2 = _bn_params(k[5], ch)
    s2 = g2 / jnp.sqrt(v2 + eps)
    Wc2_f = W_c2 * s2[:, None]
    bc2_f = b2 - m2 * s2

    return (Wqkv_f, bqkv_f, Wdw_f, bdw_f, Wc2_f, bc2_f)


# ----------------------- pure-JAX reference (NCHW) -------------------------
def reference(x, fused, num_head):
    Wqkv_f, bqkv_f, Wdw_f, bdw_f, Wc2_f, bc2_f = fused
    b, c, h, w = x.shape
    dim_head = c // num_head
    dim_key = dim_head // 2
    hp = jax.lax.Precision.HIGHEST

    qkv = jnp.einsum('oc,bchw->bohw', Wqkv_f, x, precision=hp)
    qkv = qkv + bqkv_f[None, :, None, None]
    qkv = qkv.reshape(b, num_head, 2 * dim_key + dim_head, h * w)
    q = qkv[:, :, :dim_key]
    k = qkv[:, :, dim_key:2 * dim_key]
    v = qkv[:, :, 2 * dim_key:]
    attn = jnp.einsum('bhdn,bhdm->bhnm', q, k, precision=hp) * dim_key ** (-0.5)
    attn = jax.nn.softmax(attn, axis=-1)
    o = jnp.einsum('bhdj,bhij->bhdi', v, attn, precision=hp).reshape(b, c, h, w)
    v_img = v.reshape(b, c, h, w)
    dw = jax.lax.conv_general_dilated(
        v_img, Wdw_f, (1, 1), [(1, 1), (1, 1)],
        dimension_numbers=('NCHW', 'OIHW', 'NCHW'),
        feature_group_count=c, precision=hp)
    dw = dw + bdw_f[None, :, None, None]
    y = o + dw
    out = jnp.einsum('oc,bchw->bohw', Wc2_f, y, precision=hp)
    return out + bc2_f[None, :, None, None]


if __name__ == "__main__":
    B, CH, H, W = 2, 32, 8, 8
    NUM_HEAD = 2

    root = jax.random.PRNGKey(0)
    k_param, k_x = jax.random.split(root)
    fused_params = make_fused_params(k_param, CH, NUM_HEAD)
    kparams = fold_params_for_kernel(fused_params, NUM_HEAD, B, H, W)
    x = jax.random.normal(k_x, (B, CH, H, W), jnp.float32)

    out = jax.block_until_ready(attention_forward(x, kparams, num_head=NUM_HEAD))
    assert out.shape == (B, CH, H, W)

    ref = jax.block_until_ready(reference(x, fused_params, NUM_HEAD))
    out_f32 = out.astype(jnp.float32)
    # bf16 MXU feeds + bf16 output vs an f32 HIGHEST-precision reference:
    # expect ~1e-2-level differences, validate at a 5e-2 tolerance.
    assert jnp.allclose(out_f32, ref, atol=5e-2, rtol=5e-2), float(
        jnp.max(jnp.abs(out_f32 - ref)))

    print("KERNEL_OK")
</pallas_src>

<mosaic_0001>
module attributes {stable_mosaic.version = 11 : i64} {
  func.func @_attention_kernel(%arg0: i32, %arg1: memref<32x128xf32, #tpu.memory_space<vmem>>, %arg2: memref<64x32xbf16, #tpu.memory_space<vmem>>, %arg3: memref<64x1xf32, #tpu.memory_space<vmem>>, %arg4: memref<9x32x1xf32, #tpu.memory_space<vmem>>, %arg5: memref<32x1xf32, #tpu.memory_space<vmem>>, %arg6: memref<32x32xbf16, #tpu.memory_space<vmem>>, %arg7: memref<32x1xf32, #tpu.memory_space<vmem>>, %arg8: memref<9x1x128xf32, #tpu.memory_space<vmem>>, %arg9: memref<1x128x128xf32, #tpu.memory_space<vmem>>, %arg10: memref<32x128xbf16, #tpu.memory_space<vmem>>) attributes {dimension_semantics = [#tpu.dimension_semantics<arbitrary>], iteration_bounds = array<i64: 1>, scalar_prefetch = 0 : i64, scratch_operands = 0 : i64, tpu.core_type = #tpu.core_type<tc>, window_params = [{pipeline_mode = #tpu.pipeline_mode<synchronous>, transform_indices = @transform_0, window_bounds = array<i64: 32, 128>}, {pipeline_mode = #tpu.pipeline_mode<synchronous>, transform_indices = @transform_1, window_bounds = array<i64: 64, 32>}, {pipeline_mode = #tpu.pipeline_mode<synchronous>, transform_indices = @transform_2, window_bounds = array<i64: 64, 1>}, {pipeline_mode = #tpu.pipeline_mode<synchronous>, transform_indices = @transform_3, window_bounds = array<i64: 9, 32, 1>}, {pipeline_mode = #tpu.pipeline_mode<synchronous>, transform_indices = @transform_4, window_bounds = array<i64: 32, 1>}, {pipeline_mode = #tpu.pipeline_mode<synchronous>, transform_indices = @transform_5, window_bounds = array<i64: 32, 32>}, {pipeline_mode = #tpu.pipeline_mode<synchronous>, transform_indices = @transform_6, window_bounds = array<i64: 32, 1>}, {pipeline_mode = #tpu.pipeline_mode<synchronous>, transform_indices = @transform_7, window_bounds = array<i64: 9, 1, 128>}, {pipeline_mode = #tpu.pipeline_mode<synchronous>, transform_indices = @transform_8, window_bounds = array<i64: 1, 128, 128>}, {pipeline_mode = #tpu.pipeline_mode<synchronous>, transform_indices = @transform_9, window_bounds = array<i64: 32, 128>}]} {
    %c0 = arith.constant 0 : index
    %c0_0 = arith.constant 0 : index
    %0 = vector.load %arg1[%c0, %c0_0] : memref<32x128xf32, #tpu.memory_space<vmem>>, vector<32x128xf32>
    %1 = arith.truncf %0 : vector<32x128xf32> to vector<32x128xbf16>
    %c0_1 = arith.constant 0 : index
    %c0_2 = arith.constant 0 : index
    %2 = vector.load %arg2[%c0_1, %c0_2] : memref<64x32xbf16, #tpu.memory_space<vmem>>, vector<64x32xbf16>
    %cst = arith.constant dense<0.000000e+00> : vector<64x128xf32>
    %3 = tpu.matmul %2, %1, %cst {dimension_numbers = #tpu.dot_dimension_numbers<[1], [0], [0], [1], [0, 0, 1, 1], [], []>} : vector<64x32xbf16>, vector<32x128xbf16>, vector<64x128xf32> -> vector<64x128xf32>
    %c0_3 = arith.constant 0 : index
    %c0_4 = arith.constant 0 : index
    %4 = vector.load %arg3[%c0_3, %c0_4] : memref<64x1xf32, #tpu.memory_space<vmem>>, vector<64x1xf32>
    %5 = vector.broadcast %4 : vector<64x1xf32> to vector<64x128xf32>
    %6 = arith.addf %3, %5 : vector<64x128xf32>
    %7 = vector.extract_strided_slice %6 {offsets = [0, 0], sizes = [16, 128], strides = [1, 1]} : vector<64x128xf32> to vector<16x128xf32>
    %8 = vector.shape_cast %7 : vector<16x128xf32> to vector<2x8x128xf32>
    %9 = arith.truncf %8 : vector<2x8x128xf32> to vector<2x8x128xbf16>
    %10 = vector.extract_strided_slice %6 {offsets = [16, 0], sizes = [16, 128], strides = [1, 1]} : vector<64x128xf32> to vector<16x128xf32>
    %11 = vector.shape_cast %10 : vector<16x128xf32> to vector<2x8x128xf32>
    %12 = arith.truncf %11 : vector<2x8x128xf32> to vector<2x8x128xbf16>
    %13 = vector.extract_strided_slice %6 {offsets = [32, 0], sizes = [32, 128], strides = [1, 1]} : vector<64x128xf32> to vector<32x128xf32>
    %14 = vector.shape_cast %13 : vector<32x128xf32> to vector<2x16x128xf32>
    %15 = arith.truncf %14 : vector<2x16x128xf32> to vector<2x16x128xbf16>
    %cst_5 = arith.constant dense<0.000000e+00> : vector<2x128x128xf32>
    %16 = tpu.matmul %9, %12, %cst_5 {dimension_numbers = #tpu.dot_dimension_numbers<[1], [1], [2], [2], [0, 0, 0, 2, 1, 2], [0], [0]>} : vector<2x8x128xbf16>, vector<2x8x128xbf16>, vector<2x128x128xf32> -> vector<2x128x128xf32>
    %c0_6 = arith.constant 0 : index
    %c0_7 = arith.constant 0 : index
    %c0_8 = arith.constant 0 : index
    %17 = vector.load %arg9[%c0_6, %c0_7, %c0_8] : memref<1x128x128xf32, #tpu.memory_space<vmem>>, vector<1x128x128xf32>
    %18 = vector.broadcast %17 : vector<1x128x128xf32> to vector<2x128x128xf32>
    %19 = arith.addf %16, %18 : vector<2x128x128xf32>
    %cst_9 = arith.constant dense<0xFF800000> : vector<2x128xf32>
    %20 = vector.multi_reduction <maximumf>, %19, %cst_9 [2] : vector<2x128x128xf32> to vector<2x128xf32>
    %21 = vector.shape_cast %20 : vector<2x128xf32> to vector<2x128x1xf32>
    %22 = vector.broadcast %21 : vector<2x128x1xf32> to vector<2x128x128xf32>
    %23 = arith.subf %19, %22 : vector<2x128x128xf32>
    %24 = math.exp %23 : vector<2x128x128xf32>
    %cst_10 = arith.constant dense<0.000000e+00> : vector<2x128xf32>
    %25 = vector.multi_reduction <add>, %24, %cst_10 [2] : vector<2x128x128xf32> to vector<2x128xf32>
    %26 = vector.shape_cast %25 : vector<2x128xf32> to vector<2x128x1xf32>
    %27 = tpu.reciprocal %26 {approx = true} : vector<2x128x1xf32> -> vector<2x128x1xf32>
    %28 = vector.broadcast %27 : vector<2x128x1xf32> to vector<2x128x128xf32>
    %29 = arith.mulf %24, %28 : vector<2x128x128xf32>
    %30 = arith.truncf %29 : vector<2x128x128xf32> to vector<2x128x128xbf16>
    %cst_11 = arith.constant dense<0.000000e+00> : vector<2x16x128xf32>
    %31 = tpu.matmul %15, %30, %cst_11 {dimension_numbers = #tpu.dot_dimension_numbers<[2], [2], [1], [1], [0, 0, 0, 1, 1, 1], [0], [0]>} : vector<2x16x128xbf16>, vector<2x128x128xbf16>, vector<2x16x128xf32> -> vector<2x16x128xf32>
    %32 = vector.shape_cast %31 : vector<2x16x128xf32> to vector<32x128xf32>
    %c4 = arith.constant 4 : index
    %c0_12 = arith.constant 0 : index
    %c0_13 = arith.constant 0 : index
    %33 = vector.load %arg4[%c4, %c0_12, %c0_13] : memref<9x32x1xf32, #tpu.memory_space<vmem>>, vector<1x32x1xf32>
    %34 = vector.shape_cast %33 : vector<1x32x1xf32> to vector<32x1xf32>
    %35 = vector.broadcast %34 : vector<32x1xf32> to vector<32x128xf32>
    %36 = arith.mulf %13, %35 : vector<32x128xf32>
    %c9_i32 = arith.constant 9 : i32
    %37 = tpu.dynamic_rotate %13 by %c9_i32 dim 1 : vector<32x128xf32>, i32 -> vector<32x128xf32>
    %c0_14 = arith.constant 0 : index
    %c0_15 = arith.constant 0 : index
    %c0_16 = arith.constant 0 : index
    %38 = vector.load %arg8[%c0_14, %c0_15, %c0_16] : memref<9x1x128xf32, #tpu.memory_space<vmem>>, vector<1x1x128xf32>
    %39 = vector.shape_cast %38 : vector<1x1x128xf32> to vector<1x128xf32>
    %40 = vector.broadcast %39 : vector<1x128xf32> to vector<32x128xf32>
    %41 = arith.mulf %37, %40 : vector<32x128xf32>
    %c0_17 = arith.constant 0 : index
    %c0_18 = arith.constant 0 : index
    %c0_19 = arith.constant 0 : index
    %42 = vector.load %arg4[%c0_17, %c0_18, %c0_19] : memref<9x32x1xf32, #tpu.memory_space<vmem>>, vector<1x32x1xf32>
    %43 = vector.shape_cast %42 : vector<1x32x1xf32> to vector<32x1xf32>
    %44 = vector.broadcast %43 : vector<32x1xf32> to vector<32x128xf32>
    %45 = arith.mulf %41, %44 : vector<32x128xf32>
    %46 = arith.addf %36, %45 : vector<32x128xf32>
    %c8_i32 = arith.constant 8 : i32
    %47 = tpu.dynamic_rotate %13 by %c8_i32 dim 1 : vector<32x128xf32>, i32 -> vector<32x128xf32>
    %c1 = arith.constant 1 : index
    %c0_20 = arith.constant 0 : index
    %c0_21 = arith.constant 0 : index
    %48 = vector.load %arg8[%c1, %c0_20, %c0_21] : memref<9x1x128xf32, #tpu.memory_space<vmem>>, vector<1x1x128xf32>
    %49 = vector.shape_cast %48 : vector<1x1x128xf32> to vector<1x128xf32>
    %50 = vector.broadcast %49 : vector<1x128xf32> to vector<32x128xf32>
    %51 = arith.mulf %47, %50 : vector<32x128xf32>
    %c1_22 = arith.constant 1 : index
    %c0_23 = arith.constant 0 : index
    %c0_24 = arith.constant 0 : index
    %52 = vector.load %arg4[%c1_22, %c0_23, %c0_24] : memref<9x32x1xf32, #tpu.memory_space<vmem>>, vector<1x32x1xf32>
    %53 = vector.shape_cast %52 : vector<1x32x1xf32> to vector<32x1xf32>
    %54 = vector.broadcast %53 : vector<32x1xf32> to vector<32x128xf32>
    %55 = arith.mulf %51, %54 : vector<32x128xf32>
    %56 = arith.addf %46, %55 : vector<32x128xf32>
    %c7_i32 = arith.constant 7 : i32
    %57 = tpu.dynamic_rotate %13 by %c7_i32 dim 1 : vector<32x128xf32>, i32 -> vector<32x128xf32>
    %c2 = arith.constant 2 : index
    %c0_25 = arith.constant 0 : index
    %c0_26 = arith.constant 0 : index
    %58 = vector.load %arg8[%c2, %c0_25, %c0_26] : memref<9x1x128xf32, #tpu.memory_space<vmem>>, vector<1x1x128xf32>
    %59 = vector.shape_cast %58 : vector<1x1x128xf32> to vector<1x128xf32>
    %60 = vector.broadcast %59 : vector<1x128xf32> to vector<32x128xf32>
    %61 = arith.mulf %57, %60 : vector<32x128xf32>
    %c2_27 = arith.constant 2 : index
    %c0_28 = arith.constant 0 : index
    %c0_29 = arith.constant 0 : index
    %62 = vector.load %arg4[%c2_27, %c0_28, %c0_29] : memref<9x32x1xf32, #tpu.memory_space<vmem>>, vector<1x32x1xf32>
    %63 = vector.shape_cast %62 : vector<1x32x1xf32> to vector<32x1xf32>
    %64 = vector.broadcast %63 : vector<32x1xf32> to vector<32x128xf32>
    %65 = arith.mulf %61, %64 : vector<32x128xf32>
    %66 = arith.addf %56, %65 : vector<32x128xf32>
    %c1_i32 = arith.constant 1 : i32
    %67 = tpu.dynamic_rotate %13 by %c1_i32 dim 1 : vector<32x128xf32>, i32 -> vector<32x128xf32>
    %c3 = arith.constant 3 : index
    %c0_30 = arith.constant 0 : index
    %c0_31 = arith.constant 0 : index
    %68 = vector.load %arg8[%c3, %c0_30, %c0_31] : memref<9x1x128xf32, #tpu.memory_space<vmem>>, vector<1x1x128xf32>
    %69 = vector.shape_cast %68 : vector<1x1x128xf32> to vector<1x128xf32>
    %70 = vector.broadcast %69 : vector<1x128xf32> to vector<32x128xf32>
    %71 = arith.mulf %67, %70 : vector<32x128xf32>
    %c3_32 = arith.constant 3 : index
    %c0_33 = arith.constant 0 : index
    %c0_34 = arith.constant 0 : index
    %72 = vector.load %arg4[%c3_32, %c0_33, %c0_34] : memref<9x32x1xf32, #tpu.memory_space<vmem>>, vector<1x32x1xf32>
    %73 = vector.shape_cast %72 : vector<1x32x1xf32> to vector<32x1xf32>
    %74 = vector.broadcast %73 : vector<32x1xf32> to vector<32x128xf32>
    %75 = arith.mulf %71, %74 : vector<32x128xf32>
    %76 = arith.addf %66, %75 : vector<32x128xf32>
    %c127_i32 = arith.constant 127 : i32
    %77 = tpu.dynamic_rotate %13 by %c127_i32 dim 1 : vector<32x128xf32>, i32 -> vector<32x128xf32>
    %c5 = arith.constant 5 : index
    %c0_35 = arith.constant 0 : index
    %c0_36 = arith.constant 0 : index
    %78 = vector.load %arg8[%c5, %c0_35, %c0_36] : memref<9x1x128xf32, #tpu.memory_space<vmem>>, vector<1x1x128xf32>
    %79 = vector.shape_cast %78 : vector<1x1x128xf32> to vector<1x128xf32>
    %80 = vector.broadcast %79 : vector<1x128xf32> to vector<32x128xf32>
    %81 = arith.mulf %77, %80 : vector<32x128xf32>
    %c5_37 = arith.constant 5 : index
    %c0_38 = arith.constant 0 : index
    %c0_39 = arith.constant 0 : index
    %82 = vector.load %arg4[%c5_37, %c0_38, %c0_39] : memref<9x32x1xf32, #tpu.memory_space<vmem>>, vector<1x32x1xf32>
    %83 = vector.shape_cast %82 : vector<1x32x1xf32> to vector<32x1xf32>
    %84 = vector.broadcast %83 : vector<32x1xf32> to vector<32x128xf32>
    %85 = arith.mulf %81, %84 : vector<32x128xf32>
    %86 = arith.addf %76, %85 : vector<32x128xf32>
    %c121_i32 = arith.constant 121 : i32
    %87 = tpu.dynamic_rotate %13 by %c121_i32 dim 1 : vector<32x128xf32>, i32 -> vector<32x128xf32>
    %c6 = arith.constant 6 : index
    %c0_40 = arith.constant 0 : index
    %c0_41 = arith.constant 0 : index
    %88 = vector.load %arg8[%c6, %c0_40, %c0_41] : memref<9x1x128xf32, #tpu.memory_space<vmem>>, vector<1x1x128xf32>
    %89 = vector.shape_cast %88 : vector<1x1x128xf32> to vector<1x128xf32>
    %90 = vector.broadcast %89 : vector<1x128xf32> to vector<32x128xf32>
    %91 = arith.mulf %87, %90 : vector<32x128xf32>
    %c6_42 = arith.constant 6 : index
    %c0_43 = arith.constant 0 : index
    %c0_44 = arith.constant 0 : index
    %92 = vector.load %arg4[%c6_42, %c0_43, %c0_44] : memref<9x32x1xf32, #tpu.memory_space<vmem>>, vector<1x32x1xf32>
    %93 = vector.shape_cast %92 : vector<1x32x1xf32> to vector<32x1xf32>
    %94 = vector.broadcast %93 : vector<32x1xf32> to vector<32x128xf32>
    %95 = arith.mulf %91, %94 : vector<32x128xf32>
    %96 = arith.addf %86, %95 : vector<32x128xf32>
    %c120_i32 = arith.constant 120 : i32
    %97 = tpu.dynamic_rotate %13 by %c120_i32 dim 1 : vector<32x128xf32>, i32 -> vector<32x128xf32>
    %c7 = arith.constant 7 : index
    %c0_45 = arith.constant 0 : index
    %c0_46 = arith.constant 0 : index
    %98 = vector.load %arg8[%c7, %c0_45, %c0_46] : memref<9x1x128xf32, #tpu.memory_space<vmem>>, vector<1x1x128xf32>
    %99 = vector.shape_cast %98 : vector<1x1x128xf32> to vector<1x128xf32>
    %100 = vector.broadcast %99 : vector<1x128xf32> to vector<32x128xf32>
    %101 = arith.mulf %97, %100 : vector<32x128xf32>
    %c7_47 = arith.constant 7 : index
    %c0_48 = arith.constant 0 : index
    %c0_49 = arith.constant 0 : index
    %102 = vector.load %arg4[%c7_47, %c0_48, %c0_49] : memref<9x32x1xf32, #tpu.memory_space<vmem>>, vector<1x32x1xf32>
    %103 = vector.shape_cast %102 : vector<1x32x1xf32> to vector<32x1xf32>
    %104 = vector.broadcast %103 : vector<32x1xf32> to vector<32x128xf32>
    %105 = arith.mulf %101, %104 : vector<32x128xf32>
    %106 = arith.addf %96, %105 : vector<32x128xf32>
    %c119_i32 = arith.constant 119 : i32
    %107 = tpu.dynamic_rotate %13 by %c119_i32 dim 1 : vector<32x128xf32>, i32 -> vector<32x128xf32>
    %c8 = arith.constant 8 : index
    %c0_50 = arith.constant 0 : index
    %c0_51 = arith.constant 0 : index
    %108 = vector.load %arg8[%c8, %c0_50, %c0_51] : memref<9x1x128xf32, #tpu.memory_space<vmem>>, vector<1x1x128xf32>
    %109 = vector.shape_cast %108 : vector<1x1x128xf32> to vector<1x128xf32>
    %110 = vector.broadcast %109 : vector<1x128xf32> to vector<32x128xf32>
    %111 = arith.mulf %107, %110 : vector<32x128xf32>
    %c8_52 = arith.constant 8 : index
    %c0_53 = arith.constant 0 : index
    %c0_54 = arith.constant 0 : index
    %112 = vector.load %arg4[%c8_52, %c0_53, %c0_54] : memref<9x32x1xf32, #tpu.memory_space<vmem>>, vector<1x32x1xf32>
    %113 = vector.shape_cast %112 : vector<1x32x1xf32> to vector<32x1xf32>
    %114 = vector.broadcast %113 : vector<32x1xf32> to vector<32x128xf32>
    %115 = arith.mulf %111, %114 : vector<32x128xf32>
    %116 = arith.addf %106, %115 : vector<32x128xf32>
    %c0_55 = arith.constant 0 : index
    %c0_56 = arith.constant 0 : index
    %117 = vector.load %arg5[%c0_55, %c0_56] : memref<32x1xf32, #tpu.memory_space<vmem>>, vector<32x1xf32>
    %118 = vector.broadcast %117 : vector<32x1xf32> to vector<32x128xf32>
    %119 = arith.addf %116, %118 : vector<32x128xf32>
    %120 = arith.addf %32, %119 : vector<32x128xf32>
    %121 = arith.truncf %120 : vector<32x128xf32> to vector<32x128xbf16>
    %c0_57 = arith.constant 0 : index
    %c0_58 = arith.constant 0 : index
    %122 = vector.load %arg6[%c0_57, %c0_58] : memref<32x32xbf16, #tpu.memory_space<vmem>>, vector<32x32xbf16>
    %cst_59 = arith.constant dense<0.000000e+00> : vector<32x128xf32>
    %123 = tpu.matmul %122, %121, %cst_59 {dimension_numbers = #tpu.dot_dimension_numbers<[1], [0], [0], [1], [0, 0, 1, 1], [], []>} : vector<32x32xbf16>, vector<32x128xbf16>, vector<32x128xf32> -> vector<32x128xf32>
    %c0_60 = arith.constant 0 : index
    %c0_61 = arith.constant 0 : index
    %124 = vector.load %arg7[%c0_60, %c0_61] : memref<32x1xf32, #tpu.memory_space<vmem>>, vector<32x1xf32>
    %125 = vector.broadcast %124 : vector<32x1xf32> to vector<32x128xf32>
    %126 = arith.addf %123, %125 : vector<32x128xf32>
    %127 = arith.truncf %126 : vector<32x128xf32> to vector<32x128xbf16>
    %c0_62 = arith.constant 0 : index
    %c0_63 = arith.constant 0 : index
    %128 = vector.load %arg10[%c0_62, %c0_63] : memref<32x128xbf16, #tpu.memory_space<vmem>>, vector<32x128xbf16>
    tpu.vector_store %arg10[%c0_62, %c0_63], %127 {strides = array<i32>} : memref<32x128xbf16, #tpu.memory_space<vmem>>, vector<32x128xbf16>,
    return
  }
  func.func @transform_0(%arg0: i32) -> (i32, i32) {
    %c0_i32 = arith.constant 0 : i32
    %c0_i32_0 = arith.constant 0 : i32
    %c0_i32_1 = arith.constant 0 : i32
    return %c0_i32, %c0_i32_0 : i32, i32
  }
  func.func @transform_1(%arg0: i32) -> (i32, i32) {
    %c0_i32 = arith.constant 0 : i32
    %c0_i32_0 = arith.constant 0 : i32
    %c0_i32_1 = arith.constant 0 : i32
    return %c0_i32, %c0_i32_0 : i32, i32
  }
  func.func @transform_2(%arg0: i32) -> (i32, i32) {
    %c0_i32 = arith.constant 0 : i32
    %c0_i32_0 = arith.constant 0 : i32
    %c0_i32_1 = arith.constant 0 : i32
    return %c0_i32, %c0_i32_0 : i32, i32
  }
  func.func @transform_3(%arg0: i32) -> (i32, i32, i32) {
    %c0_i32 = arith.constant 0 : i32
    %c0_i32_0 = arith.constant 0 : i32
    %c0_i32_1 = arith.constant 0 : i32
    %c0_i32_2 = arith.constant 0 : i32
    return %c0_i32, %c0_i32_0, %c0_i32_1 : i32, i32, i32
  }
  func.func @transform_4(%arg0: i32) -> (i32, i32) {
    %c0_i32 = arith.constant 0 : i32
    %c0_i32_0 = arith.constant 0 : i32
    %c0_i32_1 = arith.constant 0 : i32
    return %c0_i32, %c0_i32_0 : i32, i32
  }
  func.func @transform_5(%arg0: i32) -> (i32, i32) {
    %c0_i32 = arith.constant 0 : i32
    %c0_i32_0 = arith.constant 0 : i32
    %c0_i32_1 = arith.constant 0 : i32
    return %c0_i32, %c0_i32_0 : i32, i32
  }
  func.func @transform_6(%arg0: i32) -> (i32, i32) {
    %c0_i32 = arith.constant 0 : i32
    %c0_i32_0 = arith.constant 0 : i32
    %c0_i32_1 = arith.constant 0 : i32
    return %c0_i32, %c0_i32_0 : i32, i32
  }
  func.func @transform_7(%arg0: i32) -> (i32, i32, i32) {
    %c0_i32 = arith.constant 0 : i32
    %c0_i32_0 = arith.constant 0 : i32
    %c0_i32_1 = arith.constant 0 : i32
    %c0_i32_2 = arith.constant 0 : i32
    return %c0_i32, %c0_i32_0, %c0_i32_1 : i32, i32, i32
  }
  func.func @transform_8(%arg0: i32) -> (i32, i32, i32) {
    %c0_i32 = arith.constant 0 : i32
    %c0_i32_0 = arith.constant 0 : i32
    %c0_i32_1 = arith.constant 0 : i32
    %c0_i32_2 = arith.constant 0 : i32
    return %c0_i32, %c0_i32_0, %c0_i32_1 : i32, i32, i32
  }
  func.func @transform_9(%arg0: i32) -> (i32, i32) {
    %c0_i32 = arith.constant 0 : i32
    %c0_i32_0 = arith.constant 0 : i32
    %c0_i32_1 = arith.constant 0 : i32
    return %c0_i32, %c0_i32_0 : i32, i32
  }
}

</mosaic_0001>

<llo_original>
// kernel: tpu_custom_call.1
$region0: #{tpu_custom_call.1}
  #allocation0 [shape = 'u32[]', space=smem, size = 0x4, offset = 0x4, fixed_abs, tag = 'smem constant byte address 0x4 - core index']
  #allocation1 [shape = 'u32[144,128]{1,0:T(1,128)}', space=vmem, size = 0x12000, scoped, tag = 'internal scratch']
  %s0 = inlined_call_operand.vmem [shape: f32[32,128], index: 0, kind: input, shape index: {}]
  %s1 = inlined_call_operand.vmem [shape: bf16[64,32], index: 1, kind: input, shape index: {}]
  %s2 = inlined_call_operand.vmem [shape: f32[64,1], index: 2, kind: input, shape index: {}]
  %s3 = inlined_call_operand.vmem [shape: f32[9,32,1], index: 3, kind: input, shape index: {}]
  %s4 = inlined_call_operand.vmem [shape: f32[32,1], index: 4, kind: input, shape index: {}]
  %s5 = inlined_call_operand.vmem [shape: bf16[32,32], index: 5, kind: input, shape index: {}]
  %s6 = inlined_call_operand.vmem [shape: f32[32,1], index: 6, kind: input, shape index: {}]
  %s7 = inlined_call_operand.vmem [shape: f32[9,1,128], index: 7, kind: input, shape index: {}]
  %s8 = inlined_call_operand.vmem [shape: f32[1,128,128], index: 8, kind: input, shape index: {}]
  %s9 = inlined_call_operand.hbm [shape: bf16[32,128], index: 9, kind: output, shape index: {}]
  %s10 = sld [smem:[#allocation0]]
  $region46: #{tpu_custom_call.1} parent=0
    _
  %s12 = ssub.s32 1, %s10
  %s13 = scalar_select 0, %s12, %s10
  $region1: #{tpu_custom_call.1} parent=0
    #allocation2 [shape = 'u8[8192]{0}', space=vmem, size = 0x2000, scoped, tag = 'output window, operand 0, single buffered']
    #allocation3 [shape = 's32[1]{0}', space=sflag, size = 0x4, scoped, tag = 'scoped memory for tpu_custom_call.1']
    %14 = vsyncpa [#allocation3], 0
    // Predicated region
    $region2: #{tpu_custom_call.1} parent=1 // pred_check
      _
    $region3: #{tpu_custom_call.1} parent=1 // pred_check_branch
      %16 = sbr.rel (0) target = $region5
    $region4: #{tpu_custom_call.1} parent=1 // pred_region
      _
    $region5: #{tpu_custom_call.1} parent=1 // pred_fallthru
      _
    // Predicated region
    $region6: #{tpu_custom_call.1} parent=1 // pred_check
      _
    $region7: #{tpu_custom_call.1} parent=1 // pred_check_branch
      %18 = sbr.rel (0) target = $region9
    $region8: #{tpu_custom_call.1} parent=1 // pred_region
      _
    $region9: #{tpu_custom_call.1} parent=1 // pred_fallthru
      _
    // Predicated region
    $region10: #{tpu_custom_call.1} parent=1 // pred_check
      _
    $region11: #{tpu_custom_call.1} parent=1 // pred_check_branch
      %20 = sbr.rel (0) target = $region13
    $region12: #{tpu_custom_call.1} parent=1 // pred_region
      _
    $region13: #{tpu_custom_call.1} parent=1 // pred_fallthru
      _
    // Predicated region
    $region14: #{tpu_custom_call.1} parent=1 // pred_check
      _
    $region15: #{tpu_custom_call.1} parent=1 // pred_check_branch
      %22 = sbr.rel (0) target = $region17
    $region16: #{tpu_custom_call.1} parent=1 // pred_region
      _
    $region17: #{tpu_custom_call.1} parent=1 // pred_fallthru
      _
    // Predicated region
    $region18: #{tpu_custom_call.1} parent=1 // pred_check
      _
    $region19: #{tpu_custom_call.1} parent=1 // pred_check_branch
      %24 = sbr.rel (0) target = $region21
    $region20: #{tpu_custom_call.1} parent=1 // pred_region
      _
    $region21: #{tpu_custom_call.1} parent=1 // pred_fallthru
      _
    // Predicated region
    $region22: #{tpu_custom_call.1} parent=1 // pred_check
      _
    $region23: #{tpu_custom_call.1} parent=1 // pred_check_branch
      %26 = sbr.rel (0) target = $region25
    $region24: #{tpu_custom_call.1} parent=1 // pred_region
      _
    $region25: #{tpu_custom_call.1} parent=1 // pred_fallthru
      _
    // Predicated region
    $region26: #{tpu_custom_call.1} parent=1 // pred_check
      _
    $region27: #{tpu_custom_call.1} parent=1 // pred_check_branch
      %28 = sbr.rel (0) target = $region29
    $region28: #{tpu_custom_call.1} parent=1 // pred_region
      _
    $region29: #{tpu_custom_call.1} parent=1 // pred_fallthru
      _
    // Predicated region
    $region30: #{tpu_custom_call.1} parent=1 // pred_check
      _
    $region31: #{tpu_custom_call.1} parent=1 // pred_check_branch
      %30 = sbr.rel (0) target = $region33
    $region32: #{tpu_custom_call.1} parent=1 // pred_region
      _
    $region33: #{tpu_custom_call.1} parent=1 // pred_fallthru
      _
    // Predicated region
    $region34: #{tpu_custom_call.1} parent=1 // pred_check
      _
    $region35: #{tpu_custom_call.1} parent=1 // pred_check_branch
      %32 = sbr.rel (0) target = $region37
    $region36: #{tpu_custom_call.1} parent=1 // pred_region
      _
    $region37: #{tpu_custom_call.1} parent=1 // pred_fallthru
      _
    %v34 = vld [vmem:[%s0] sm:$0xff]
    %v35 = vld [vmem:[%s0 + $0x8] sm:$0xff]
    %v36 = vld [vmem:[%s0 + $0x10] sm:$0xff]
    %v37 = vld [vmem:[%s0 + $0x18] sm:$0xff]
    %v38 = vpack.c.bf16 %v35, %v34
    %v39 = vpack.c.bf16 %v37, %v36
    %v40 = vld [vmem:[%s1] sm:$0xf]
    %v41 = vld [vmem:[%s1 + $0x4] sm:$0xf]
    %v42 = vld [vmem:[%s1 + $0x8] sm:$0xf]
    %v43 = vld [vmem:[%s1 + $0xc] sm:$0xf]
    %v44 = vld [vmem:[%s1 + $0x10] sm:$0xf]
    %v45 = vld [vmem:[%s1 + $0x14] sm:$0xf]
    %v46 = vld [vmem:[%s1 + $0x18] sm:$0xf]
    %v47 = vld [vmem:[%s1 + $0x1c] sm:$0xf]
    %v48 = vld [vmem:[%s2] sm:$0xff]
    %v49 = vld [vmem:[%s2 + $0x8] sm:$0xff]
    %v50 = vld [vmem:[%s2 + $0x10] sm:$0xff]
    %v51 = vld [vmem:[%s2 + $0x18] sm:$0xff]
    %v52 = vld [vmem:[%s2 + $0x20] sm:$0xff]
    %v53 = vld [vmem:[%s2 + $0x28] sm:$0xff]
    %v54 = vld [vmem:[%s2 + $0x30] sm:$0xff]
    %v55 = vld [vmem:[%s2 + $0x38] sm:$0xff]
    %57 = vset.pattern.permute.xlu0 0
    %58 = vperm.xlu0 %57, %v48
    %v59 = vpop.permute.xlu0 %58
    %62 = vset.pattern.permute.xlu0 0
    %63 = vperm.xlu0 %62, %v49
    %v64 = vpop.permute.xlu0 %63
    %67 = vset.pattern.permute.xlu0 0
    %68 = vperm.xlu0 %67, %v50
    %v69 = vpop.permute.xlu0 %68
    %72 = vset.pattern.permute.xlu0 0
    %73 = vperm.xlu0 %72, %v51
    %v74 = vpop.permute.xlu0 %73
    %77 = vset.pattern.permute.xlu0 0
    %78 = vperm.xlu0 %77, %v52
    %v79 = vpop.permute.xlu0 %78
    %82 = vset.pattern.permute.xlu0 0
    %83 = vperm.xlu0 %82, %v53
    %v84 = vpop.permute.xlu0 %83
    %87 = vset.pattern.permute.xlu0 0
    %88 = vperm.xlu0 %87, %v54
    %v89 = vpop.permute.xlu0 %88
    %92 = vset.pattern.permute.xlu0 0
    %93 = vperm.xlu0 %92, %v55
    %v94 = vpop.permute.xlu0 %93
    %v104 = vunpack.c.l.b16 %v40
    %v105 = vunpack.c.l.b16 %v41
    %v106 = vunpack.c.l.b16 %v42
    %v107 = vunpack.c.l.b16 %v43
    %v108 = vunpack.c.l.b16 %v44
    %v109 = vunpack.c.l.b16 %v45
    %v110 = vunpack.c.l.b16 %v46
    %v111 = vunpack.c.l.b16 %v47
    %v112 = vpack.c.b16 %v105, %v104
    %v113 = vpack.c.b16 %v107, %v106
    %v114 = vpack.c.b16 %v109, %v108
    %v115 = vpack.c.b16 %v111, %v110
    %vm116 = vcmask 261120
    %v118 = vsel %vm116, %v112, 0
    %v121 = vsel %vm116, %v113, 0
    %v124 = vsel %vm116, %v114, 0
    %v127 = vsel %vm116, %v115, 0
    %129 = vmatprep.subr.bf16.mxu0 0
    %130 = vmatpush1.bf16.msra.mxu0 %v38
    %131 = vmatprep.subr.bf16.mxu0 0
    %132 = vmatpush1.bf16.msra.mxu0 %v39
    %133 = vmatprep.subr.bf16.mxu0 0
    %134 = vmatpush1.bf16.msra.mxu0 0
    %135 = vmatprep.subr.bf16.mxu0 0
    %136 = vmatpush1.bf16.msra.mxu0 0
    %137 = vmatprep.subr.bf16.mxu0 0
    %138 = vmatpush1.bf16.msra.mxu0 0
    %139 = vmatprep.subr.bf16.mxu0 0
    %140 = vmatpush1.bf16.msra.mxu0 0
    %141 = vmatprep.subr.bf16.mxu0 0
    %142 = vmatpush1.bf16.msra.mxu0 0
    %143 = vmatprep.subr.bf16.mxu0 0
    %144 = vmatpush1.bf16.msra.mxu0 0
    %145 = vmatprep.subr.bf16.mxu0 0
    %146 = vmatpush1.bf16.msra.mxu0 0
    %147 = vmatprep.subr.bf16.mxu0 0
    %148 = vmatpush1.bf16.msra.mxu0 0
    %149 = vmatprep.subr.bf16.mxu0 0
    %150 = vmatpush1.bf16.msra.mxu0 0
    %151 = vmatprep.subr.bf16.mxu0 0
    %152 = vmatpush1.bf16.msra.mxu0 0
    %153 = vmatprep.subr.bf16.mxu0 0
    %154 = vmatpush1.bf16.msra.mxu0 0
    %155 = vmatprep.subr.bf16.mxu0 0
    %156 = vmatpush1.bf16.msra.mxu0 0
    %157 = vmatprep.subr.bf16.mxu0 0
    %158 = vmatpush1.bf16.msra.mxu0 0
    %159 = vmatprep.subr.bf16.mxu0 0
    %160 = vmatpush1.bf16.msra.mxu0 0
    %161 = vmatprep.mubr.bf16.mxu0 0
    %162 = vmatmul.mubr.bf16.gmra.mrb[0].mxu0 %v118
    %v163 = vpop.f32.mrb[0].mxu0
    %v164 = vadd.f32 %v59, %v163
    %v165 = vpop.f32.mrb[0].mxu0
    %v166 = vpop.f32.mrb[0].mxu0
    %v167 = vadd.f32 %v64, %v166
    %v168 = vpop.f32.mrb[0].mxu0
    %169 = vmatprep.mubr.bf16.mxu0 0
    %170 = vmatmul.mubr.bf16.gmra.mrb[0].mxu0 %v121
    %v171 = vpop.f32.mrb[0].mxu0
    %v172 = vadd.f32 %v69, %v171
    %v173 = vpop.f32.mrb[0].mxu0
    %v174 = vpop.f32.mrb[0].mxu0
    %v175 = vadd.f32 %v74, %v174
    %v176 = vpop.f32.mrb[0].mxu0
    %177 = vmatprep.mubr.bf16.mxu0 0
    %178 = vmatmul.mubr.bf16.gmra.mrb[0].mxu0 %v124
    %v179 = vpop.f32.mrb[0].mxu0
    %v180 = vadd.f32 %v79, %v179
    %v181 = vpop.f32.mrb[0].mxu0
    %v182 = vpop.f32.mrb[0].mxu0
    %v183 = vadd.f32 %v84, %v182
    %v184 = vpop.f32.mrb[0].mxu0
    %185 = vmatprep.mubr.bf16.mxu0 0
    %186 = vmatmul.mubr.bf16.gmra.mrb[0].mxu0 %v127
    %v187 = vpop.f32.mrb[0].mxu0
    %v188 = vadd.f32 %v89, %v187
    %v189 = vpop.f32.mrb[0].mxu0
    %v190 = vpop.f32.mrb[0].mxu0
    %v191 = vadd.f32 %v94, %v190
    %v192 = vpop.f32.mrb[0].mxu0
    %193 = vdwg.mxu0
    %v194 = vpack.c.bf16 %v164, %v164
    %v195 = vpack.c.bf16 %v167, %v167
    %v196 = vpack.c.bf16 %v172, %v172
    %v197 = vpack.c.bf16 %v175, %v175
    %v198 = vpack.c.bf16 %v183, %v180
    %v199 = vpack.c.bf16 %v191, %v188
    %v200 = vld [vmem:[%s8] sm:$0xff]
    %v201 = vld [vmem:[%s8 + $0x8] sm:$0xff]
    %v202 = vld [vmem:[%s8 + $0x10] sm:$0xff]
    %v203 = vld [vmem:[%s8 + $0x18] sm:$0xff]
    %v204 = vld [vmem:[%s8 + $0x20] sm:$0xff]
    %v205 = vld [vmem:[%s8 + $0x28] sm:$0xff]
    %v206 = vld [vmem:[%s8 + $0x30] sm:$0xff]
    %v207 = vld [vmem:[%s8 + $0x38] sm:$0xff]
    %v208 = vld [vmem:[%s8 + $0x40] sm:$0xff]
    %v209 = vld [vmem:[%s8 + $0x48] sm:$0xff]
    %v210 = vld [vmem:[%s8 + $0x50] sm:$0xff]
    %v211 = vld [vmem:[%s8 + $0x58] sm:$0xff]
    %v212 = vld [vmem:[%s8 + $0x60] sm:$0xff]
    %v213 = vld [vmem:[%s8 + $0x68] sm:$0xff]
    %v214 = vld [vmem:[%s8 + $0x70] sm:$0xff]
    %v215 = vld [vmem:[%s8 + $0x78] sm:$0xff]
    %216 = vxpose.xlu0.c.b16.start [1/8] %v194, 128
    %217 = vxpose.xlu0.c.b16.cont [2/8] 0, 128
    %218 = vxpose.xlu0.c.b16.cont [3/8] 0, 128
    %219 = vxpose.xlu0.c.b16.cont [4/8] 0, 128
    %220 = vxpose.xlu0.c.b16.cont [5/8] 0, 128
    %221 = vxpose.xlu0.c.b16.cont [6/8] 0, 128
    %222 = vxpose.xlu0.c.b16.cont [7/8] 0, 128
    %223 = vxpose.xlu0.c.b16.end [8/8] 0, 128
    %v224 = vpop.trf.xlu0
    %v225 = vpop.trf.xlu0
    %v226 = vpop.trf.xlu0
    %v227 = vpop.trf.xlu0
    %v228 = vpop.trf.xlu0
    %v229 = vpop.trf.xlu0
    %v230 = vpop.trf.xlu0
    %v231 = vpop.trf.xlu0
    %vm232 = vcmask 64512
    %v234 = vsel %vm232, %v224, 0
    %v237 = vsel %vm232, %v225, 0
    %v240 = vsel %vm232, %v226, 0
    %v243 = vsel %vm232, %v227, 0
    %v246 = vsel %vm232, %v228, 0
    %v249 = vsel %vm232, %v229, 0
    %v252 = vsel %vm232, %v230, 0
    %v255 = vsel %vm232, %v231, 0
    %vm257 = vcmask 1043456
    %v259 = vsel %vm257, %v196, 0
    %261 = vmatprep.subr.bf16.mxu0 0
    %262 = vmatpush1.bf16.msra.mxu0 %v259
    %263 = vmatprep.subr.bf16.mxu0 0
    %264 = vmatpush1.bf16.msra.mxu0 0
    %265 = vmatprep.subr.bf16.mxu0 0
    %266 = vmatpush1.bf16.msra.mxu0 0
    %267 = vmatprep.subr.bf16.mxu0 0
    %268 = vmatpush1.bf16.msra.mxu0 0
    %269 = vmatprep.subr.bf16.mxu0 0
    %270 = vmatpush1.bf16.msra.mxu0 0
    %271 = vmatprep.subr.bf16.mxu0 0
    %272 = vmatpush1.bf16.msra.mxu0 0
    %273 = vmatprep.subr.bf16.mxu0 0
    %274 = vmatpush1.bf16.msra.mxu0 0
    %275 = vmatprep.subr.bf16.mxu0 0
    %276 = vmatpush1.bf16.msra.mxu0 0
    %277 = vmatprep.subr.bf16.mxu0 0
    %278 = vmatpush1.bf16.msra.mxu0 0
    %279 = vmatprep.subr.bf16.mxu0 0
    %280 = vmatpush1.bf16.msra.mxu0 0
    %281 = vmatprep.subr.bf16.mxu0 0
    %282 = vmatpush1.bf16.msra.mxu0 0
    %283 = vmatprep.subr.bf16.mxu0 0
    %284 = vmatpush1.bf16.msra.mxu0 0
    %285 = vmatprep.subr.bf16.mxu0 0
    %286 = vmatpush1.bf16.msra.mxu0 0
    %287 = vmatprep.subr.bf16.mxu0 0
    %288 = vmatpush1.bf16.msra.mxu0 0
    %289 = vmatprep.subr.bf16.mxu0 0
    %290 = vmatpush1.bf16.msra.mxu0 0
    %291 = vmatprep.subr.bf16.mxu0 0
    %292 = vmatpush1.bf16.msra.mxu0 0
    %293 = vmatprep.mubr.bf16.mxu0 0
    %294 = vmatmul.mubr.bf16.gmra.mrb[0].mxu0 %v234
    %v295 = vpop.f32.mrb[0].mxu0
    %v296 = vadd.f32 %v200, %v295
    %v297 = vpop.f32.mrb[0].mxu0
    %v298 = vpop.f32.mrb[0].mxu0
    %v299 = vadd.f32 %v201, %v298
    %v300 = vpop.f32.mrb[0].mxu0
    %301 = vmatprep.mubr.bf16.mxu0 0
    %302 = vmatmul.mubr.bf16.gmra.mrb[0].mxu0 %v237
    %v303 = vpop.f32.mrb[0].mxu0
    %v304 = vadd.f32 %v202, %v303
    %v305 = vpop.f32.mrb[0].mxu0
    %v306 = vpop.f32.mrb[0].mxu0
    %v307 = vadd.f32 %v203, %v306
    %v308 = vpop.f32.mrb[0].mxu0
    %309 = vmatprep.mubr.bf16.mxu0 0
    %310 = vmatmul.mubr.bf16.gmra.mrb[0].mxu0 %v240
    %v311 = vpop.f32.mrb[0].mxu0
    %v312 = vadd.f32 %v204, %v311
    %v313 = vpop.f32.mrb[0].mxu0
    %v314 = vpop.f32.mrb[0].mxu0
    %v315 = vadd.f32 %v205, %v314
    %v316 = vpop.f32.mrb[0].mxu0
    %317 = vmatprep.mubr.bf16.mxu0 0
    %318 = vmatmul.mubr.bf16.gmra.mrb[0].mxu0 %v243
    %v319 = vpop.f32.mrb[0].mxu0
    %v320 = vadd.f32 %v206, %v319
    %v321 = vpop.f32.mrb[0].mxu0
    %v322 = vpop.f32.mrb[0].mxu0
    %v323 = vadd.f32 %v207, %v322
    %v324 = vpop.f32.mrb[0].mxu0
    %325 = vmatprep.mubr.bf16.mxu0 0
    %326 = vmatmul.mubr.bf16.gmra.mrb[0].mxu0 %v246
    %v327 = vpop.f32.mrb[0].mxu0
    %v328 = vadd.f32 %v208, %v327
    %v329 = vpop.f32.mrb[0].mxu0
    %v330 = vpop.f32.mrb[0].mxu0
    %v331 = vadd.f32 %v209, %v330
    %v332 = vpop.f32.mrb[0].mxu0
    %333 = vmatprep.mubr.bf16.mxu0 0
    %334 = vmatmul.mubr.bf16.gmra.mrb[0].mxu0 %v249
    %v335 = vpop.f32.mrb[0].mxu0
    %v336 = vadd.f32 %v210, %v335
    %v337 = vpop.f32.mrb[0].mxu0
    %v338 = vpop.f32.mrb[0].mxu0
    %v339 = vadd.f32 %v211, %v338
    %v340 = vpop.f32.mrb[0].mxu0
    %341 = vmatprep.mubr.bf16.mxu0 0
    %342 = vmatmul.mubr.bf16.gmra.mrb[0].mxu0 %v252
    %v343 = vpop.f32.mrb[0].mxu0
    %v344 = vadd.f32 %v212, %v343
    %v345 = vpop.f32.mrb[0].mxu0
    %v346 = vpop.f32.mrb[0].mxu0
    %v347 = vadd.f32 %v213, %v346
    %v348 = vpop.f32.mrb[0].mxu0
    %349 = vmatprep.mubr.bf16.mxu0 0
    %350 = vmatmul.mubr.bf16.gmra.mrb[0].mxu0 %v255
    %v351 = vpop.f32.mrb[0].mxu0
    %v352 = vadd.f32 %v214, %v351
    %v353 = vpop.f32.mrb[0].mxu0
    %v354 = vpop.f32.mrb[0].mxu0
    %v355 = vadd.f32 %v215, %v354
    %v356 = vpop.f32.mrb[0].mxu0
    %357 = vdwg.mxu0
    %358 = vxpose.xlu0.c.b16.start [1/8] %v195, 128
    %359 = vxpose.xlu0.c.b16.cont [2/8] 0, 128
    %360 = vxpose.xlu0.c.b16.cont [3/8] 0, 128
    %361 = vxpose.xlu0.c.b16.cont [4/8] 0, 128
    %362 = vxpose.xlu0.c.b16.cont [5/8] 0, 128
    %363 = vxpose.xlu0.c.b16.cont [6/8] 0, 128
    %364 = vxpose.xlu0.c.b16.cont [7/8] 0, 128
    %365 = vxpose.xlu0.c.b16.end [8/8] 0, 128
    %v366 = vpop.trf.xlu0
    %v367 = vpop.trf.xlu0
    %v368 = vpop.trf.xlu0
    %v369 = vpop.trf.xlu0
    %v370 = vpop.trf.xlu0
    %v371 = vpop.trf.xlu0
    %v372 = vpop.trf.xlu0
    %v373 = vpop.trf.xlu0
    %v375 = vsel %vm232, %v366, 0
    %v378 = vsel %vm232, %v367, 0
    %v381 = vsel %vm232, %v368, 0
    %v384 = vsel %vm232, %v369, 0
    %v387 = vsel %vm232, %v370, 0
    %v390 = vsel %vm232, %v371, 0
    %v393 = vsel %vm232, %v372, 0
    %v396 = vsel %vm232, %v373, 0
    %v399 = vsel %vm257, %v197, 0
    %401 = vmatprep.subr.bf16.mxu0 0
    %402 = vmatpush1.bf16.msra.mxu0 %v399
    %403 = vmatprep.subr.bf16.mxu0 0
    %404 = vmatpush1.bf16.msra.mxu0 0
    %405 = vmatprep.subr.bf16.mxu0 0
    %406 = vmatpush1.bf16.msra.mxu0 0
    %407 = vmatprep.subr.bf16.mxu0 0
    %408 = vmatpush1.bf16.msra.mxu0 0
    %409 = vmatprep.subr.bf16.mxu0 0
    %410 = vmatpush1.bf16.msra.mxu0 0
    %411 = vmatprep.subr.bf16.mxu0 0
    %412 = vmatpush1.bf16.msra.mxu0 0
    %413 = vmatprep.subr.bf16.mxu0 0
    %414 = vmatpush1.bf16.msra.mxu0 0
    %415 = vmatprep.subr.bf16.mxu0 0
    %416 = vmatpush1.bf16.msra.mxu0 0
    %417 = vmatprep.subr.bf16.mxu0 0
    %418 = vmatpush1.bf16.msra.mxu0 0
    %419 = vmatprep.subr.bf16.mxu0 0
    %420 = vmatpush1.bf16.msra.mxu0 0
    %421 = vmatprep.subr.bf16.mxu0 0
    %422 = vmatpush1.bf16.msra.mxu0 0
    %423 = vmatprep.subr.bf16.mxu0 0
    %424 = vmatpush1.bf16.msra.mxu0 0
    %425 = vmatprep.subr.bf16.mxu0 0
    %426 = vmatpush1.bf16.msra.mxu0 0
    %427 = vmatprep.subr.bf16.mxu0 0
    %428 = vmatpush1.bf16.msra.mxu0 0
    %429 = vmatprep.subr.bf16.mxu0 0
    %430 = vmatpush1.bf16.msra.mxu0 0
    %431 = vmatprep.subr.bf16.mxu0 0
    %432 = vmatpush1.bf16.msra.mxu0 0
    %433 = vmatprep.mubr.bf16.mxu0 0
    %434 = vmatmul.mubr.bf16.gmra.mrb[0].mxu0 %v375
    %v435 = vpop.f32.mrb[0].mxu0
    %v436 = vadd.f32 %v200, %v435
    %v437 = vpop.f32.mrb[0].mxu0
    %v438 = vpop.f32.mrb[0].mxu0
    %v439 = vadd.f32 %v201, %v438
    %v440 = vpop.f32.mrb[0].mxu0
    %441 = vmatprep.mubr.bf16.mxu0 0
    %442 = vmatmul.mubr.bf16.gmra.mrb[0].mxu0 %v378
    %v443 = vpop.f32.mrb[0].mxu0
    %v444 = vadd.f32 %v202, %v443
    %v445 = vpop.f32.mrb[0].mxu0
    %v446 = vpop.f32.mrb[0].mxu0
    %v447 = vadd.f32 %v203, %v446
    %v448 = vpop.f32.mrb[0].mxu0
    %449 = vmatprep.mubr.bf16.mxu0 0
    %450 = vmatmul.mubr.bf16.gmra.mrb[0].mxu0 %v381
    %v451 = vpop.f32.mrb[0].mxu0
    %v452 = vadd.f32 %v204, %v451
    %v453 = vpop.f32.mrb[0].mxu0
    %v454 = vpop.f32.mrb[0].mxu0
    %v455 = vadd.f32 %v205, %v454
    %v456 = vpop.f32.mrb[0].mxu0
    %457 = vmatprep.mubr.bf16.mxu0 0
    %458 = vmatmul.mubr.bf16.gmra.mrb[0].mxu0 %v384
    %v459 = vpop.f32.mrb[0].mxu0
    %v460 = vadd.f32 %v206, %v459
    %v461 = vpop.f32.mrb[0].mxu0
    %v462 = vpop.f32.mrb[0].mxu0
    %v463 = vadd.f32 %v207, %v462
    %v464 = vpop.f32.mrb[0].mxu0
    %465 = vmatprep.mubr.bf16.mxu0 0
    %466 = vmatmul.mubr.bf16.gmra.mrb[0].mxu0 %v387
    %v467 = vpop.f32.mrb[0].mxu0
    %v468 = vadd.f32 %v208, %v467
    %v469 = vpop.f32.mrb[0].mxu0
    %v470 = vpop.f32.mrb[0].mxu0
    %v471 = vadd.f32 %v209, %v470
    %v472 = vpop.f32.mrb[0].mxu0
    %473 = vmatprep.mubr.bf16.mxu0 0
    %474 = vmatmul.mubr.bf16.gmra.mrb[0].mxu0 %v390
    %v475 = vpop.f32.mrb[0].mxu0
    %v476 = vadd.f32 %v210, %v475
    %v477 = vpop.f32.mrb[0].mxu0
    %v478 = vpop.f32.mrb[0].mxu0
    %v479 = vadd.f32 %v211, %v478
    %v480 = vpop.f32.mrb[0].mxu0
    %481 = vmatprep.mubr.bf16.mxu0 0
    %482 = vmatmul.mubr.bf16.gmra.mrb[0].mxu0 %v393
    %v483 = vpop.f32.mrb[0].mxu0
    %v484 = vadd.f32 %v212, %v483
    %v485 = vpop.f32.mrb[0].mxu0
    %v486 = vpop.f32.mrb[0].mxu0
    %v487 = vadd.f32 %v213, %v486
    %v488 = vpop.f32.mrb[0].mxu0
    %489 = vmatprep.mubr.bf16.mxu0 0
    %490 = vmatmul.mubr.bf16.gmra.mrb[0].mxu0 %v396
    %v491 = vpop.f32.mrb[0].mxu0
    %v492 = vadd.f32 %v214, %v491
    %v493 = vpop.f32.mrb[0].mxu0
    %v494 = vpop.f32.mrb[0].mxu0
    %v495 = vadd.f32 %v215, %v494
    %v496 = vpop.f32.mrb[0].mxu0
    %497 = vdwg.mxu0
    %498 = vmax.xlane.f32.xlu0 %v296
    %v499 = vpop.xlane.xlu0 %498
    %500 = vmax.xlane.f32.xlu0 %v299
    %v501 = vpop.xlane.xlu0 %500
    %502 = vmax.xlane.f32.xlu0 %v304
    %v503 = vpop.xlane.xlu0 %502
    %504 = vmax.xlane.f32.xlu0 %v307
    %v505 = vpop.xlane.xlu0 %504
    %506 = vmax.xlane.f32.xlu0 %v312
    %v507 = vpop.xlane.xlu0 %506
    %508 = vmax.xlane.f32.xlu0 %v315
    %v509 = vpop.xlane.xlu0 %508
    %510 = vmax.xlane.f32.xlu0 %v320
    %v511 = vpop.xlane.xlu0 %510
    %512 = vmax.xlane.f32.xlu0 %v323
    %v513 = vpop.xlane.xlu0 %512
    %514 = vmax.xlane.f32.xlu0 %v328
    %v515 = vpop.xlane.xlu0 %514
    %516 = vmax.xlane.f32.xlu0 %v331
    %v517 = vpop.xlane.xlu0 %516
    %518 = vmax.xlane.f32.xlu0 %v336
    %v519 = vpop.xlane.xlu0 %518
    %520 = vmax.xlane.f32.xlu0 %v339
    %v521 = vpop.xlane.xlu0 %520
    %522 = vmax.xlane.f32.xlu0 %v344
    %v523 = vpop.xlane.xlu0 %522
    %524 = vmax.xlane.f32.xlu0 %v347
    %v525 = vpop.xlane.xlu0 %524
    %526 = vmax.xlane.f32.xlu0 %v352
    %v527 = vpop.xlane.xlu0 %526
    %528 = vmax.xlane.f32.xlu0 %v355
    %v529 = vpop.xlane.xlu0 %528
    %530 = vmax.xlane.f32.xlu0 %v436
    %v531 = vpop.xlane.xlu0 %530
    %532 = vmax.xlane.f32.xlu0 %v439
    %v533 = vpop.xlane.xlu0 %532
    %534 = vmax.xlane.f32.xlu0 %v444
    %v535 = vpop.xlane.xlu0 %534
    %536 = vmax.xlane.f32.xlu0 %v447
    %v537 = vpop.xlane.xlu0 %536
    %538 = vmax.xlane.f32.xlu0 %v452
    %v539 = vpop.xlane.xlu0 %538
    %540 = vmax.xlane.f32.xlu0 %v455
    %v541 = vpop.xlane.xlu0 %540
    %542 = vmax.xlane.f32.xlu0 %v460
    %v543 = vpop.xlane.xlu0 %542
    %544 = vmax.xlane.f32.xlu0 %v463
    %v545 = vpop.xlane.xlu0 %544
    %546 = vmax.xlane.f32.xlu0 %v468
    %v547 = vpop.xlane.xlu0 %546
    %548 = vmax.xlane.f32.xlu0 %v471
    %v549 = vpop.xlane.xlu0 %548
    %550 = vmax.xlane.f32.xlu0 %v476
    %v551 = vpop.xlane.xlu0 %550
    %552 = vmax.xlane.f32.xlu0 %v479
    %v553 = vpop.xlane.xlu0 %552
    %554 = vmax.xlane.f32.xlu0 %v484
    %v555 = vpop.xlane.xlu0 %554
    %556 = vmax.xlane.f32.xlu0 %v487
    %v557 = vpop.xlane.xlu0 %556
    %558 = vmax.xlane.f32.xlu0 %v492
    %v559 = vpop.xlane.xlu0 %558
    %560 = vmax.xlane.f32.xlu0 %v495
    %v561 = vpop.xlane.xlu0 %560
    %v562 = vsub.f32 %v296, %v499
    %v563 = vsub.f32 %v299, %v501
    %v564 = vsub.f32 %v304, %v503
    %v565 = vsub.f32 %v307, %v505
    %v566 = vsub.f32 %v312, %v507
    %v567 = vsub.f32 %v315, %v509
    %v568 = vsub.f32 %v320, %v511
    %v569 = vsub.f32 %v323, %v513
    %v570 = vsub.f32 %v328, %v515
    %v571 = vsub.f32 %v331, %v517
    %v572 = vsub.f32 %v336, %v519
    %v573 = vsub.f32 %v339, %v521
    %v574 = vsub.f32 %v344, %v523
    %v575 = vsub.f32 %v347, %v525
    %v576 = vsub.f32 %v352, %v527
    %v577 = vsub.f32 %v355, %v529
    %v578 = vsub.f32 %v436, %v531
    %v579 = vsub.f32 %v439, %v533
    %v580 = vsub.f32 %v444, %v535
    %v581 = vsub.f32 %v447, %v537
    %v582 = vsub.f32 %v452, %v539
    %v583 = vsub.f32 %v455, %v541
    %v584 = vsub.f32 %v460, %v543
    %v585 = vsub.f32 %v463, %v545
    %v586 = vsub.f32 %v468, %v547
    %v587 = vsub.f32 %v471, %v549
    %v588 = vsub.f32 %v476, %v551
    %v589 = vsub.f32 %v479, %v553
    %v590 = vsub.f32 %v484, %v555
    %v591 = vsub.f32 %v487, %v557
    %v592 = vsub.f32 %v492, %v559
    %v593 = vsub.f32 %v495, %v561
    %v594 = vmul.f32 %v562, 1.442695
    %v595 = vpow.pop %v594
    %v596 = vmul.f32 %v563, 1.442695
    %v597 = vpow.pop %v596
    %v598 = vmul.f32 %v564, 1.442695
    %v599 = vpow.pop %v598
    %v600 = vmul.f32 %v565, 1.442695
    %v601 = vpow.pop %v600
    %v602 = vmul.f32 %v566, 1.442695
    %v603 = vpow.pop %v602
    %v604 = vmul.f32 %v567, 1.442695
    %v605 = vpow.pop %v604
    %v606 = vmul.f32 %v568, 1.442695
    %v607 = vpow.pop %v606
    %v608 = vmul.f32 %v569, 1.442695
    %v609 = vpow.pop %v608
    %v610 = vmul.f32 %v570, 1.442695
    %v611 = vpow.pop %v610
    %v612 = vmul.f32 %v571, 1.442695
    %v613 = vpow.pop %v612
    %v614 = vmul.f32 %v572, 1.442695
    %v615 = vpow.pop %v614
    %v616 = vmul.f32 %v573, 1.442695
    %v617 = vpow.pop %v616
    %v618 = vmul.f32 %v574, 1.442695
    %v619 = vpow.pop %v618
    %v620 = vmul.f32 %v575, 1.442695
    %v621 = vpow.pop %v620
    %v622 = vmul.f32 %v576, 1.442695
    %v623 = vpow.pop %v622
    %v624 = vmul.f32 %v577, 1.442695
    %v625 = vpow.pop %v624
    %v626 = vmul.f32 %v578, 1.442695
    %v627 = vpow.pop %v626
    %v628 = vmul.f32 %v579, 1.442695
    %v629 = vpow.pop %v628
    %v630 = vmul.f32 %v580, 1.442695
    %v631 = vpow.pop %v630
    %v632 = vmul.f32 %v581, 1.442695
    %v633 = vpow.pop %v632
    %v634 = vmul.f32 %v582, 1.442695
    %v635 = vpow.pop %v634
    %v636 = vmul.f32 %v583, 1.442695
    %v637 = vpow.pop %v636
    %v638 = vmul.f32 %v584, 1.442695
    %v639 = vpow.pop %v638
    %v640 = vmul.f32 %v585, 1.442695
    %v641 = vpow.pop %v640
    %v642 = vmul.f32 %v586, 1.442695
    %v643 = vpow.pop %v642
    %v644 = vmul.f32 %v587, 1.442695
    %v645 = vpow.pop %v644
    %v646 = vmul.f32 %v588, 1.442695
    %v647 = vpow.pop %v646
    %v648 = vmul.f32 %v589, 1.442695
    %v649 = vpow.pop %v648
    %v650 = vmul.f32 %v590, 1.442695
    %v651 = vpow.pop %v650
    %v652 = vmul.f32 %v591, 1.442695
    %v653 = vpow.pop %v652
    %v654 = vmul.f32 %v592, 1.442695
    %v655 = vpow.pop %v654
    %v656 = vmul.f32 %v593, 1.442695
    %v657 = vpow.pop %v656
    %658 = vadd.xlane.f32.xlu0 %v595
    %v659 = vpop.xlane.xlu0 %658
    %660 = vadd.xlane.f32.xlu0 %v597
    %v661 = vpop.xlane.xlu0 %660
    %662 = vadd.xlane.f32.xlu0 %v599
    %v663 = vpop.xlane.xlu0 %662
    %664 = vadd.xlane.f32.xlu0 %v601
    %v665 = vpop.xlane.xlu0 %664
    %666 = vadd.xlane.f32.xlu0 %v603
    %v667 = vpop.xlane.xlu0 %666
    %668 = vadd.xlane.f32.xlu0 %v605
    %v669 = vpop.xlane.xlu0 %668
    %670 = vadd.xlane.f32.xlu0 %v607
    %v671 = vpop.xlane.xlu0 %670
    %672 = vadd.xlane.f32.xlu0 %v609
    %v673 = vpop.xlane.xlu0 %672
    %674 = vadd.xlane.f32.xlu0 %v611
    %v675 = vpop.xlane.xlu0 %674
    %676 = vadd.xlane.f32.xlu0 %v613
    %v677 = vpop.xlane.xlu0 %676
    %678 = vadd.xlane.f32.xlu0 %v615
    %v679 = vpop.xlane.xlu0 %678
    %680 = vadd.xlane.f32.xlu0 %v617
    %v681 = vpop.xlane.xlu0 %680
    %682 = vadd.xlane.f32.xlu0 %v619
    %v683 = vpop.xlane.xlu0 %682
    %684 = vadd.xlane.f32.xlu0 %v621
    %v685 = vpop.xlane.xlu0 %684
    %686 = vadd.xlane.f32.xlu0 %v623
    %v687 = vpop.xlane.xlu0 %686
    %688 = vadd.xlane.f32.xlu0 %v625
    %v689 = vpop.xlane.xlu0 %688
    %690 = vadd.xlane.f32.xlu0 %v627
    %v691 = vpop.xlane.xlu0 %690
    %692 = vadd.xlane.f32.xlu0 %v629
    %v693 = vpop.xlane.xlu0 %692
    %694 = vadd.xlane.f32.xlu0 %v631
    %v695 = vpop.xlane.xlu0 %694
    %696 = vadd.xlane.f32.xlu0 %v633
    %v697 = vpop.xlane.xlu0 %696
    %698 = vadd.xlane.f32.xlu0 %v635
    %v699 = vpop.xlane.xlu0 %698
    %700 = vadd.xlane.f32.xlu0 %v637
    %v701 = vpop.xlane.xlu0 %700
    %702 = vadd.xlane.f32.xlu0 %v639
    %v703 = vpop.xlane.xlu0 %702
    %704 = vadd.xlane.f32.xlu0 %v641
    %v705 = vpop.xlane.xlu0 %704
    %706 = vadd.xlane.f32.xlu0 %v643
    %v707 = vpop.xlane.xlu0 %706
    %708 = vadd.xlane.f32.xlu0 %v645
    %v709 = vpop.xlane.xlu0 %708
    %710 = vadd.xlane.f32.xlu0 %v647
    %v711 = vpop.xlane.xlu0 %710
    %712 = vadd.xlane.f32.xlu0 %v649
    %v713 = vpop.xlane.xlu0 %712
    %714 = vadd.xlane.f32.xlu0 %v651
    %v715 = vpop.xlane.xlu0 %714
    %716 = vadd.xlane.f32.xlu0 %v653
    %v717 = vpop.xlane.xlu0 %716
    %718 = vadd.xlane.f32.xlu0 %v655
    %v719 = vpop.xlane.xlu0 %718
    %720 = vadd.xlane.f32.xlu0 %v657
    %v721 = vpop.xlane.xlu0 %720
    %v722 = vrcp.pop %v659
    %v723 = vrcp.pop %v661
    %v724 = vrcp.pop %v663
    %v725 = vrcp.pop %v665
    %v726 = vrcp.pop %v667
    %v727 = vrcp.pop %v669
    %v728 = vrcp.pop %v671
    %v729 = vrcp.pop %v673
    %v730 = vrcp.pop %v675
    %v731 = vrcp.pop %v677
    %v732 = vrcp.pop %v679
    %v733 = vrcp.pop %v681
    %v734 = vrcp.pop %v683
    %v735 = vrcp.pop %v685
    %v736 = vrcp.pop %v687
    %v737 = vrcp.pop %v689
    %v738 = vrcp.pop %v691
    %v739 = vrcp.pop %v693
    %v740 = vrcp.pop %v695
    %v741 = vrcp.pop %v697
    %v742 = vrcp.pop %v699
    %v743 = vrcp.pop %v701
    %v744 = vrcp.pop %v703
    %v745 = vrcp.pop %v705
    %v746 = vrcp.pop %v707
    %v747 = vrcp.pop %v709
    %v748 = vrcp.pop %v711
    %v749 = vrcp.pop %v713
    %v750 = vrcp.pop %v715
    %v751 = vrcp.pop %v717
    %v752 = vrcp.pop %v719
    %v753 = vrcp.pop %v721
    %v754 = vmul.f32 %v595, %v722
    %v755 = vmul.f32 %v597, %v723
    %v756 = vmul.f32 %v599, %v724
    %v757 = vmul.f32 %v601, %v725
    %v758 = vmul.f32 %v603, %v726
    %v759 = vmul.f32 %v605, %v727
    %v760 = vmul.f32 %v607, %v728
    %v761 = vmul.f32 %v609, %v729
    %v762 = vmul.f32 %v611, %v730
    %v763 = vmul.f32 %v613, %v731
    %v764 = vmul.f32 %v615, %v732
    %v765 = vmul.f32 %v617, %v733
    %v766 = vmul.f32 %v619, %v734
    %v767 = vmul.f32 %v621, %v735
    %v768 = vmul.f32 %v623, %v736
    %v769 = vmul.f32 %v625, %v737
    %v770 = vmul.f32 %v627, %v738
    %v771 = vmul.f32 %v629, %v739
    %v772 = vmul.f32 %v631, %v740
    %v773 = vmul.f32 %v633, %v741
    %v774 = vmul.f32 %v635, %v742
    %v775 = vmul.f32 %v637, %v743
    %v776 = vmul.f32 %v639, %v744
    %v777 = vmul.f32 %v641, %v745
    %v778 = vmul.f32 %v643, %v746
    %v779 = vmul.f32 %v645, %v747
    %v780 = vmul.f32 %v647, %v748
    %v781 = vmul.f32 %v649, %v749
    %v782 = vmul.f32 %v651, %v750
    %v783 = vmul.f32 %v653, %v751
    %v784 = vmul.f32 %v655, %v752
    %v785 = vmul.f32 %v657, %v753
    %v786 = vpack.c.bf16 %v755, %v754
    %v787 = vpack.c.bf16 %v757, %v756
    %v788 = vpack.c.bf16 %v759, %v758
    %v789 = vpack.c.bf16 %v761, %v760
    %v790 = vpack.c.bf16 %v763, %v762
    %v791 = vpack.c.bf16 %v765, %v764
    %v792 = vpack.c.bf16 %v767, %v766
    %v793 = vpack.c.bf16 %v769, %v768
    %v794 = vpack.c.bf16 %v771, %v770
    %v795 = vpack.c.bf16 %v773, %v772
    %v796 = vpack.c.bf16 %v775, %v774
    %v797 = vpack.c.bf16 %v777, %v776
    %v798 = vpack.c.bf16 %v779, %v778
    %v799 = vpack.c.bf16 %v781, %v780
    %v800 = vpack.c.bf16 %v783, %v782
    %v801 = vpack.c.bf16 %v785, %v784
    %802 = vmatprep.subr.bf16.mxu0 0
    %803 = vmatpush1.bf16.xpose.msra.mxu0 %v786
    %804 = vmatprep.subr.bf16.mxu0 0
    %805 = vmatpush1.bf16.xpose.msra.mxu0 %v787
    %806 = vmatprep.subr.bf16.mxu0 0
    %807 = vmatpush1.bf16.xpose.msra.mxu0 %v788
    %808 = vmatprep.subr.bf16.mxu0 0
    %809 = vmatpush1.bf16.xpose.msra.mxu0 %v789
    %810 = vmatprep.subr.bf16.mxu0 0
    %811 = vmatpush1.bf16.xpose.msra.mxu0 %v790
    %812 = vmatprep.subr.bf16.mxu0 0
    %813 = vmatpush1.bf16.xpose.msra.mxu0 %v791
    %814 = vmatprep.subr.bf16.mxu0 0
    %815 = vmatpush1.bf16.xpose.msra.mxu0 %v792
    %816 = vmatprep.subr.bf16.mxu0 0
    %817 = vmatpush1.bf16.xpose.msra.mxu0 %v793
    %818 = vmatprep.subr.bf16.mxu0 0
    %819 = vmatpush1.bf16.xpose.msra.mxu0 0
    %820 = vmatprep.subr.bf16.mxu0 0
    %821 = vmatpush1.bf16.xpose.msra.mxu0 0
    %822 = vmatprep.subr.bf16.mxu0 0
    %823 = vmatpush1.bf16.xpose.msra.mxu0 0
    %824 = vmatprep.subr.bf16.mxu0 0
    %825 = vmatpush1.bf16.xpose.msra.mxu0 0
    %826 = vmatprep.subr.bf16.mxu0 0
    %827 = vmatpush1.bf16.xpose.msra.mxu0 0
    %828 = vmatprep.subr.bf16.mxu0 0
    %829 = vmatpush1.bf16.xpose.msra.mxu0 0
    %830 = vmatprep.subr.bf16.mxu0 0
    %831 = vmatpush1.bf16.xpose.msra.mxu0 0
    %832 = vmatprep.subr.bf16.mxu0 0
    %833 = vmatpush1.bf16.xpose.msra.mxu0 0
    %834 = vmatprep.mubr.bf16.mxu0 0
    %835 = vmatmul.mubr.bf16.gmra.mrb[0].mxu0 %v198
    %v836 = vpop.f32.mrb[0].mxu0
    %v837 = vadd.f32 0.0, %v836
    %v838 = vpop.f32.mrb[0].mxu0
    %v839 = vpop.f32.mrb[0].mxu0
    %v840 = vadd.f32 0.0, %v839
    %v841 = vpop.f32.mrb[0].mxu0
    %842 = vdwg.mxu0
    %843 = vmatprep.subr.bf16.mxu0 0
    %844 = vmatpush1.bf16.xpose.msra.mxu0 %v794
    %845 = vmatprep.subr.bf16.mxu0 0
    %846 = vmatpush1.bf16.xpose.msra.mxu0 %v795
    %847 = vmatprep.subr.bf16.mxu0 0
    %848 = vmatpush1.bf16.xpose.msra.mxu0 %v796
    %849 = vmatprep.subr.bf16.mxu0 0
    %850 = vmatpush1.bf16.xpose.msra.mxu0 %v797
    %851 = vmatprep.subr.bf16.mxu0 0
    %852 = vmatpush1.bf16.xpose.msra.mxu0 %v798
    %853 = vmatprep.subr.bf16.mxu0 0
    %854 = vmatpush1.bf16.xpose.msra.mxu0 %v799
    %855 = vmatprep.subr.bf16.mxu0 0
    %856 = vmatpush1.bf16.xpose.msra.mxu0 %v800
    %857 = vmatprep.subr.bf16.mxu0 0
    %858 = vmatpush1.bf16.xpose.msra.mxu0 %v801
    %859 = vmatprep.subr.bf16.mxu0 0
    %860 = vmatpush1.bf16.xpose.msra.mxu0 0
    %861 = vmatprep.subr.bf16.mxu0 0
    %862 = vmatpush1.bf16.xpose.msra.mxu0 0
    %863 = vmatprep.subr.bf16.mxu0 0
    %864 = vmatpush1.bf16.xpose.msra.mxu0 0
    %865 = vmatprep.subr.bf16.mxu0 0
    %866 = vmatpush1.bf16.xpose.msra.mxu0 0
    %867 = vmatprep.subr.bf16.mxu0 0
    %868 = vmatpush1.bf16.xpose.msra.mxu0 0
    %869 = vmatprep.subr.bf16.mxu0 0
    %870 = vmatpush1.bf16.xpose.msra.mxu0 0
    %871 = vmatprep.subr.bf16.mxu0 0
    %872 = vmatpush1.bf16.xpose.msra.mxu0 0
    %873 = vmatprep.subr.bf16.mxu0 0
    %874 = vmatpush1.bf16.xpose.msra.mxu0 0
    %875 = vmatprep.mubr.bf16.mxu0 0
    %876 = vmatmul.mubr.bf16.gmra.mrb[0].mxu0 %v199
    %v877 = vpop.f32.mrb[0].mxu0
    %v878 = vadd.f32 0.0, %v877
    %v879 = vpop.f32.mrb[0].mxu0
    %v880 = vpop.f32.mrb[0].mxu0
    %v881 = vadd.f32 0.0, %v880
    %v882 = vpop.f32.mrb[0].mxu0
    %883 = vdwg.mxu0
    %s884 = scalar_lea.vmem %s3, 128
    %v885 = vld [vmem:[%s884] sm:$0xff]
    %v886 = vld [vmem:[%s884 + $0x8] sm:$0xff]
    %v887 = vld [vmem:[%s884 + $0x10] sm:$0xff]
    %v888 = vld [vmem:[%s884 + $0x18] sm:$0xff]
    %890 = vset.pattern.permute.xlu0 0
    %891 = vperm.xlu0 %890, %v885
    %v892 = vpop.permute.xlu0 %891
    %895 = vset.pattern.permute.xlu0 0
    %896 = vperm.xlu0 %895, %v886
    %v897 = vpop.permute.xlu0 %896
    %900 = vset.pattern.permute.xlu0 0
    %901 = vperm.xlu0 %900, %v887
    %v902 = vpop.permute.xlu0 %901
    %905 = vset.pattern.permute.xlu0 0
    %906 = vperm.xlu0 %905, %v888
    %v907 = vpop.permute.xlu0 %906
    %v909 = vmul.f32 %v180, %v892
    %v910 = vmul.f32 %v183, %v897
    %v911 = vmul.f32 %v188, %v902
    %v912 = vmul.f32 %v191, %v907
    %913 = vrot.lane.b32.xlu0 %v180, 9
    %v914 = vpop.permute.xlu0 %913
    %915 = vrot.lane.b32.xlu0 %v183, 9
    %v916 = vpop.permute.xlu0 %915
    %917 = vrot.lane.b32.xlu0 %v188, 9
    %v918 = vpop.permute.xlu0 %917
    %919 = vrot.lane.b32.xlu0 %v191, 9
    %v920 = vpop.permute.xlu0 %919
    %v921 = vld [vmem:[%s7] sm:$0x1]
    %v923 = vlaneseq
    %v924 = vshrl.u32 %v923, 7
    %v925 = vsub.s32 0, %v924
    %v926 = vrot.slane %v921, %v925
    %v928 = vmul.f32 %v914, %v926
    %v929 = vmul.f32 %v916, %v926
    %v930 = vmul.f32 %v918, %v926
    %v931 = vmul.f32 %v920, %v926
    %v932 = vld [vmem:[%s3] sm:$0xff]
    %v933 = vld [vmem:[%s3 + $0x8] sm:$0xff]
    %v934 = vld [vmem:[%s3 + $0x10] sm:$0xff]
    %v935 = vld [vmem:[%s3 + $0x18] sm:$0xff]
    %937 = vset.pattern.permute.xlu0 0
    %938 = vperm.xlu0 %937, %v932
    %v939 = vpop.permute.xlu0 %938
    %942 = vset.pattern.permute.xlu0 0
    %943 = vperm.xlu0 %942, %v933
    %v944 = vpop.permute.xlu0 %943
    %947 = vset.pattern.permute.xlu0 0
    %948 = vperm.xlu0 %947, %v934
    %v949 = vpop.permute.xlu0 %948
    %952 = vset.pattern.permute.xlu0 0
    %953 = vperm.xlu0 %952, %v935
    %v954 = vpop.permute.xlu0 %953
    %v956 = vmul.f32 %v928, %v939
    %v957 = vmul.f32 %v929, %v944
    %v958 = vmul.f32 %v930, %v949
    %v959 = vmul.f32 %v931, %v954
    %v960 = vadd.f32 %v909, %v956
    %v961 = vadd.f32 %v910, %v957
    %v962 = vadd.f32 %v911, %v958
    %v963 = vadd.f32 %v912, %v959
    %964 = vrot.lane.b32.xlu0 %v180, 8
    %v965 = vpop.permute.xlu0 %964
    %966 = vrot.lane.b32.xlu0 %v183, 8
    %v967 = vpop.permute.xlu0 %966
    %968 = vrot.lane.b32.xlu0 %v188, 8
    %v969 = vpop.permute.xlu0 %968
    %970 = vrot.lane.b32.xlu0 %v191, 8
    %v971 = vpop.permute.xlu0 %970
    %s972 = scalar_lea.vmem %s7, 1
    %v973 = vld [vmem:[%s972] sm:$0x1]
    %v975 = vlaneseq
    %v976 = vshrl.u32 %v975, 7
    %v977 = vsub.s32 0, %v976
    %v978 = vrot.slane %v973, %v977
    %v980 = vmul.f32 %v965, %v978
    %v981 = vmul.f32 %v967, %v978
    %v982 = vmul.f32 %v969, %v978
    %v983 = vmul.f32 %v971, %v978
    %s984 = scalar_lea.vmem %s3, 32
    %v985 = vld [vmem:[%s984] sm:$0xff]
    %v986 = vld [vmem:[%s984 + $0x8] sm:$0xff]
    %v987 = vld [vmem:[%s984 + $0x10] sm:$0xff]
    %v988 = vld [vmem:[%s984 + $0x18] sm:$0xff]
    %990 = vset.pattern.permute.xlu0 0
    %991 = vperm.xlu0 %990, %v985
    %v992 = vpop.permute.xlu0 %991
    %995 = vset.pattern.permute.xlu0 0
    %996 = vperm.xlu0 %995, %v986
    %v997 = vpop.permute.xlu0 %996
    %1000 = vset.pattern.permute.xlu0 0
    %1001 = vperm.xlu0 %1000, %v987
    %v1002 = vpop.permute.xlu0 %1001
    %1005 = vset.pattern.permute.xlu0 0
    %1006 = vperm.xlu0 %1005, %v988
    %v1007 = vpop.permute.xlu0 %1006
    %v1009 = vmul.f32 %v980, %v992
    %v1010 = vmul.f32 %v981, %v997
    %v1011 = vmul.f32 %v982, %v1002
    %v1012 = vmul.f32 %v983, %v1007
    %v1013 = vadd.f32 %v960, %v1009
    %v1014 = vadd.f32 %v961, %v1010
    %v1015 = vadd.f32 %v962, %v1011
    %v1016 = vadd.f32 %v963, %v1012
    %1017 = vrot.lane.b32.xlu0 %v180, 7
    %v1018 = vpop.permute.xlu0 %1017
    %1019 = vrot.lane.b32.xlu0 %v183, 7
    %v1020 = vpop.permute.xlu0 %1019
    %1021 = vrot.lane.b32.xlu0 %v188, 7
    %v1022 = vpop.permute.xlu0 %1021
    %1023 = vrot.lane.b32.xlu0 %v191, 7
    %v1024 = vpop.permute.xlu0 %1023
    %s1025 = scalar_lea.vmem %s7, 2
    %v1026 = vld [vmem:[%s1025] sm:$0x1]
    %v1028 = vlaneseq
    %v1029 = vshrl.u32 %v1028, 7
    %v1030 = vsub.s32 0, %v1029
    %v1031 = vrot.slane %v1026, %v1030
    %v1033 = vmul.f32 %v1018, %v1031
    %v1034 = vmul.f32 %v1020, %v1031
    %v1035 = vmul.f32 %v1022, %v1031
    %v1036 = vmul.f32 %v1024, %v1031
    %s1037 = scalar_lea.vmem %s3, 64
    %v1038 = vld [vmem:[%s1037] sm:$0xff]
    %v1039 = vld [vmem:[%s1037 + $0x8] sm:$0xff]
    %v1040 = vld [vmem:[%s1037 + $0x10] sm:$0xff]
    %v1041 = vld [vmem:[%s1037 + $0x18] sm:$0xff]
    %1043 = vset.pattern.permute.xlu0 0
    %1044 = vperm.xlu0 %1043, %v1038
    %v1045 = vpop.permute.xlu0 %1044
    %1048 = vset.pattern.permute.xlu0 0
    %1049 = vperm.xlu0 %1048, %v1039
    %v1050 = vpop.permute.xlu0 %1049
    %1053 = vset.pattern.permute.xlu0 0
    %1054 = vperm.xlu0 %1053, %v1040
    %v1055 = vpop.permute.xlu0 %1054
    %1058 = vset.pattern.permute.xlu0 0
    %1059 = vperm.xlu0 %1058, %v1041
    %v1060 = vpop.permute.xlu0 %1059
    %v1062 = vmul.f32 %v1033, %v1045
    %v1063 = vmul.f32 %v1034, %v1050
    %v1064 = vmul.f32 %v1035, %v1055
    %v1065 = vmul.f32 %v1036, %v1060
    %v1066 = vadd.f32 %v1013, %v1062
    %v1067 = vadd.f32 %v1014, %v1063
    %v1068 = vadd.f32 %v1015, %v1064
    %v1069 = vadd.f32 %v1016, %v1065
    %1070 = vrot.lane.b32.xlu0 %v180, 1
    %v1071 = vpop.permute.xlu0 %1070
    %1072 = vrot.lane.b32.xlu0 %v183, 1
    %v1073 = vpop.permute.xlu0 %1072
    %1074 = vrot.lane.b32.xlu0 %v188, 1
    %v1075 = vpop.permute.xlu0 %1074
    %1076 = vrot.lane.b32.xlu0 %v191, 1
    %v1077 = vpop.permute.xlu0 %1076
    %s1078 = scalar_lea.vmem %s7, 3
    %v1079 = vld [vmem:[%s1078] sm:$0x1]
    %v1081 = vlaneseq
    %v1082 = vshrl.u32 %v1081, 7
    %v1083 = vsub.s32 0, %v1082
    %v1084 = vrot.slane %v1079, %v1083
    %v1086 = vmul.f32 %v1071, %v1084
    %v1087 = vmul.f32 %v1073, %v1084
    %v1088 = vmul.f32 %v1075, %v1084
    %v1089 = vmul.f32 %v1077, %v1084
    %s1090 = scalar_lea.vmem %s3, 96
    %v1091 = vld [vmem:[%s1090] sm:$0xff]
    %v1092 = vld [vmem:[%s1090 + $0x8] sm:$0xff]
    %v1093 = vld [vmem:[%s1090 + $0x10] sm:$0xff]
    %v1094 = vld [vmem:[%s1090 + $0x18] sm:$0xff]
    %1096 = vset.pattern.permute.xlu0 0
    %1097 = vperm.xlu0 %1096, %v1091
    %v1098 = vpop.permute.xlu0 %1097
    %1101 = vset.pattern.permute.xlu0 0
    %1102 = vperm.xlu0 %1101, %v1092
    %v1103 = vpop.permute.xlu0 %1102
    %1106 = vset.pattern.permute.xlu0 0
    %1107 = vperm.xlu0 %1106, %v1093
    %v1108 = vpop.permute.xlu0 %1107
    %1111 = vset.pattern.permute.xlu0 0
    %1112 = vperm.xlu0 %1111, %v1094
    %v1113 = vpop.permute.xlu0 %1112
    %v1115 = vmul.f32 %v1086, %v1098
    %v1116 = vmul.f32 %v1087, %v1103
    %v1117 = vmul.f32 %v1088, %v1108
    %v1118 = vmul.f32 %v1089, %v1113
    %v1119 = vadd.f32 %v1066, %v1115
    %v1120 = vadd.f32 %v1067, %v1116
    %v1121 = vadd.f32 %v1068, %v1117
    %v1122 = vadd.f32 %v1069, %v1118
    %1123 = vrot.lane.b32.xlu0 %v180, 127
    %v1124 = vpop.permute.xlu0 %1123
    %1125 = vrot.lane.b32.xlu0 %v183, 127
    %v1126 = vpop.permute.xlu0 %1125
    %1127 = vrot.lane.b32.xlu0 %v188, 127
    %v1128 = vpop.permute.xlu0 %1127
    %1129 = vrot.lane.b32.xlu0 %v191, 127
    %v1130 = vpop.permute.xlu0 %1129
    %s1131 = scalar_lea.vmem %s7, 5
    %v1132 = vld [vmem:[%s1131] sm:$0x1]
    %v1134 = vlaneseq
    %v1135 = vshrl.u32 %v1134, 7
    %v1136 = vsub.s32 0, %v1135
    %v1137 = vrot.slane %v1132, %v1136
    %v1139 = vmul.f32 %v1124, %v1137
    %v1140 = vmul.f32 %v1126, %v1137
    %v1141 = vmul.f32 %v1128, %v1137
    %v1142 = vmul.f32 %v1130, %v1137
    %s1143 = scalar_lea.vmem %s3, 160
    %v1144 = vld [vmem:[%s1143] sm:$0xff]
    %v1145 = vld [vmem:[%s1143 + $0x8] sm:$0xff]
    %v1146 = vld [vmem:[%s1143 + $0x10] sm:$0xff]
    %v1147 = vld [vmem:[%s1143 + $0x18] sm:$0xff]
    %1149 = vset.pattern.permute.xlu0 0
    %1150 = vperm.xlu0 %1149, %v1144
    %v1151 = vpop.permute.xlu0 %1150
    %1154 = vset.pattern.permute.xlu0 0
    %1155 = vperm.xlu0 %1154, %v1145
    %v1156 = vpop.permute.xlu0 %1155
    %1159 = vset.pattern.permute.xlu0 0
    %1160 = vperm.xlu0 %1159, %v1146
    %v1161 = vpop.permute.xlu0 %1160
    %1164 = vset.pattern.permute.xlu0 0
    %1165 = vperm.xlu0 %1164, %v1147
    %v1166 = vpop.permute.xlu0 %1165
    %v1168 = vmul.f32 %v1139, %v1151
    %v1169 = vmul.f32 %v1140, %v1156
    %v1170 = vmul.f32 %v1141, %v1161
    %v1171 = vmul.f32 %v1142, %v1166
    %v1172 = vadd.f32 %v1119, %v1168
    %v1173 = vadd.f32 %v1120, %v1169
    %v1174 = vadd.f32 %v1121, %v1170
    %v1175 = vadd.f32 %v1122, %v1171
    %1176 = vrot.lane.b32.xlu0 %v180, 121
    %v1177 = vpop.permute.xlu0 %1176
    %1178 = vrot.lane.b32.xlu0 %v183, 121
    %v1179 = vpop.permute.xlu0 %1178
    %1180 = vrot.lane.b32.xlu0 %v188, 121
    %v1181 = vpop.permute.xlu0 %1180
    %1182 = vrot.lane.b32.xlu0 %v191, 121
    %v1183 = vpop.permute.xlu0 %1182
    %s1184 = scalar_lea.vmem %s7, 6
    %v1185 = vld [vmem:[%s1184] sm:$0x1]
    %v1187 = vlaneseq
    %v1188 = vshrl.u32 %v1187, 7
    %v1189 = vsub.s32 0, %v1188
    %v1190 = vrot.slane %v1185, %v1189
    %v1192 = vmul.f32 %v1177, %v1190
    %v1193 = vmul.f32 %v1179, %v1190
    %v1194 = vmul.f32 %v1181, %v1190
    %v1195 = vmul.f32 %v1183, %v1190
    %s1196 = scalar_lea.vmem %s3, 192
    %v1197 = vld [vmem:[%s1196] sm:$0xff]
    %v1198 = vld [vmem:[%s1196 + $0x8] sm:$0xff]
    %v1199 = vld [vmem:[%s1196 + $0x10] sm:$0xff]
    %v1200 = vld [vmem:[%s1196 + $0x18] sm:$0xff]
    %1202 = vset.pattern.permute.xlu0 0
    %1203 = vperm.xlu0 %1202, %v1197
    %v1204 = vpop.permute.xlu0 %1203
    %1207 = vset.pattern.permute.xlu0 0
    %1208 = vperm.xlu0 %1207, %v1198
    %v1209 = vpop.permute.xlu0 %1208
    %1212 = vset.pattern.permute.xlu0 0
    %1213 = vperm.xlu0 %1212, %v1199
    %v1214 = vpop.permute.xlu0 %1213
    %1217 = vset.pattern.permute.xlu0 0
    %1218 = vperm.xlu0 %1217, %v1200
    %v1219 = vpop.permute.xlu0 %1218
    %v1221 = vmul.f32 %v1192, %v1204
    %v1222 = vmul.f32 %v1193, %v1209
    %v1223 = vmul.f32 %v1194, %v1214
    %v1224 = vmul.f32 %v1195, %v1219
    %v1225 = vadd.f32 %v1172, %v1221
    %v1226 = vadd.f32 %v1173, %v1222
    %v1227 = vadd.f32 %v1174, %v1223
    %v1228 = vadd.f32 %v1175, %v1224
    %1229 = vrot.lane.b32.xlu0 %v180, 120
    %v1230 = vpop.permute.xlu0 %1229
    %1231 = vrot.lane.b32.xlu0 %v183, 120
    %v1232 = vpop.permute.xlu0 %1231
    %1233 = vrot.lane.b32.xlu0 %v188, 120
    %v1234 = vpop.permute.xlu0 %1233
    %1235 = vrot.lane.b32.xlu0 %v191, 120
    %v1236 = vpop.permute.xlu0 %1235
    %s1237 = scalar_lea.vmem %s7, 7
    %v1238 = vld [vmem:[%s1237] sm:$0x1]
    %v1240 = vlaneseq
    %v1241 = vshrl.u32 %v1240, 7
    %v1242 = vsub.s32 0, %v1241
    %v1243 = vrot.slane %v1238, %v1242
    %v1245 = vmul.f32 %v1230, %v1243
    %v1246 = vmul.f32 %v1232, %v1243
    %v1247 = vmul.f32 %v1234, %v1243
    %v1248 = vmul.f32 %v1236, %v1243
    %s1249 = scalar_lea.vmem %s3, 224
    %v1250 = vld [vmem:[%s1249] sm:$0xff]
    %v1251 = vld [vmem:[%s1249 + $0x8] sm:$0xff]
    %v1252 = vld [vmem:[%s1249 + $0x10] sm:$0xff]
    %v1253 = vld [vmem:[%s1249 + $0x18] sm:$0xff]
    %1255 = vset.pattern.permute.xlu0 0
    %1256 = vperm.xlu0 %1255, %v1250
    %v1257 = vpop.permute.xlu0 %1256
    %1260 = vset.pattern.permute.xlu0 0
    %1261 = vperm.xlu0 %1260, %v1251
    %v1262 = vpop.permute.xlu0 %1261
    %1265 = vset.pattern.permute.xlu0 0
    %1266 = vperm.xlu0 %1265, %v1252
    %v1267 = vpop.permute.xlu0 %1266
    %1270 = vset.pattern.permute.xlu0 0
    %1271 = vperm.xlu0 %1270, %v1253
    %v1272 = vpop.permute.xlu0 %1271
    %v1274 = vmul.f32 %v1245, %v1257
    %v1275 = vmul.f32 %v1246, %v1262
    %v1276 = vmul.f32 %v1247, %v1267
    %v1277 = vmul.f32 %v1248, %v1272
    %v1278 = vadd.f32 %v1225, %v1274
    %v1279 = vadd.f32 %v1226, %v1275
    %v1280 = vadd.f32 %v1227, %v1276
    %v1281 = vadd.f32 %v1228, %v1277
    %1282 = vrot.lane.b32.xlu0 %v180, 119
    %v1283 = vpop.permute.xlu0 %1282
    %1284 = vrot.lane.b32.xlu0 %v183, 119
    %v1285 = vpop.permute.xlu0 %1284
    %1286 = vrot.lane.b32.xlu0 %v188, 119
    %v1287 = vpop.permute.xlu0 %1286
    %1288 = vrot.lane.b32.xlu0 %v191, 119
    %v1289 = vpop.permute.xlu0 %1288
    %s1290 = scalar_lea.vmem %s7, 8
    %v1291 = vld [vmem:[%s1290] sm:$0x1]
    %v1293 = vlaneseq
    %v1294 = vshrl.u32 %v1293, 7
    %v1295 = vsub.s32 0, %v1294
    %v1296 = vrot.slane %v1291, %v1295
    %v1298 = vmul.f32 %v1283, %v1296
    %v1299 = vmul.f32 %v1285, %v1296
    %v1300 = vmul.f32 %v1287, %v1296
    %v1301 = vmul.f32 %v1289, %v1296
    %s1302 = scalar_lea.vmem %s3, 256
    %v1303 = vld [vmem:[%s1302] sm:$0xff]
    %v1304 = vld [vmem:[%s1302 + $0x8] sm:$0xff]
    %v1305 = vld [vmem:[%s1302 + $0x10] sm:$0xff]
    %v1306 = vld [vmem:[%s1302 + $0x18] sm:$0xff]
    %1308 = vset.pattern.permute.xlu0 0
    %1309 = vperm.xlu0 %1308, %v1303
    %v1310 = vpop.permute.xlu0 %1309
    %1313 = vset.pattern.permute.xlu0 0
    %1314 = vperm.xlu0 %1313, %v1304
    %v1315 = vpop.permute.xlu0 %1314
    %1318 = vset.pattern.permute.xlu0 0
    %1319 = vperm.xlu0 %1318, %v1305
    %v1320 = vpop.permute.xlu0 %1319
    %1323 = vset.pattern.permute.xlu0 0
    %1324 = vperm.xlu0 %1323, %v1306
    %v1325 = vpop.permute.xlu0 %1324
    %v1327 = vmul.f32 %v1298, %v1310
    %v1328 = vmul.f32 %v1299, %v1315
    %v1329 = vmul.f32 %v1300, %v1320
    %v1330 = vmul.f32 %v1301, %v1325
    %v1331 = vadd.f32 %v1278, %v1327
    %v1332 = vadd.f32 %v1279, %v1328
    %v1333 = vadd.f32 %v1280, %v1329
    %v1334 = vadd.f32 %v1281, %v1330
    %v1335 = vld [vmem:[%s4] sm:$0xff]
    %v1336 = vld [vmem:[%s4 + $0x8] sm:$0xff]
    %v1337 = vld [vmem:[%s4 + $0x10] sm:$0xff]
    %v1338 = vld [vmem:[%s4 + $0x18] sm:$0xff]
    %1340 = vset.pattern.permute.xlu0 0
    %1341 = vperm.xlu0 %1340, %v1335
    %v1342 = vpop.permute.xlu0 %1341
    %1345 = vset.pattern.permute.xlu0 0
    %1346 = vperm.xlu0 %1345, %v1336
    %v1347 = vpop.permute.xlu0 %1346
    %1350 = vset.pattern.permute.xlu0 0
    %1351 = vperm.xlu0 %1350, %v1337
    %v1352 = vpop.permute.xlu0 %1351
    %1355 = vset.pattern.permute.xlu0 0
    %1356 = vperm.xlu0 %1355, %v1338
    %v1357 = vpop.permute.xlu0 %1356
    %v1359 = vadd.f32 %v1331, %v1342
    %v1360 = vadd.f32 %v1332, %v1347
    %v1361 = vadd.f32 %v1333, %v1352
    %v1362 = vadd.f32 %v1334, %v1357
    %v1363 = vadd.f32 %v837, %v1359
    %v1364 = vadd.f32 %v840, %v1360
    %v1365 = vadd.f32 %v878, %v1361
    %v1366 = vadd.f32 %v881, %v1362
    %v1367 = vpack.c.bf16 %v1364, %v1363
    %v1368 = vpack.c.bf16 %v1366, %v1365
    %v1369 = vld [vmem:[%s5] sm:$0xf]
    %v1370 = vld [vmem:[%s5 + $0x4] sm:$0xf]
    %v1371 = vld [vmem:[%s5 + $0x8] sm:$0xf]
    %v1372 = vld [vmem:[%s5 + $0xc] sm:$0xf]
    %v1373 = vld [vmem:[%s6] sm:$0xff]
    %v1374 = vld [vmem:[%s6 + $0x8] sm:$0xff]
    %v1375 = vld [vmem:[%s6 + $0x10] sm:$0xff]
    %v1376 = vld [vmem:[%s6 + $0x18] sm:$0xff]
    %1378 = vset.pattern.permute.xlu0 0
    %1379 = vperm.xlu0 %1378, %v1373
    %v1380 = vpop.permute.xlu0 %1379
    %1383 = vset.pattern.permute.xlu0 0
    %1384 = vperm.xlu0 %1383, %v1374
    %v1385 = vpop.permute.xlu0 %1384
    %1388 = vset.pattern.permute.xlu0 0
    %1389 = vperm.xlu0 %1388, %v1375
    %v1390 = vpop.permute.xlu0 %1389
    %1393 = vset.pattern.permute.xlu0 0
    %1394 = vperm.xlu0 %1393, %v1376
    %v1395 = vpop.permute.xlu0 %1394
    %v1401 = vunpack.c.l.b16 %v1369
    %v1402 = vunpack.c.l.b16 %v1370
    %v1403 = vunpack.c.l.b16 %v1371
    %v1404 = vunpack.c.l.b16 %v1372
    %v1405 = vpack.c.b16 %v1402, %v1401
    %v1406 = vpack.c.b16 %v1404, %v1403
    %v1408 = vsel %vm116, %v1405, 0
    %v1411 = vsel %vm116, %v1406, 0
    %1413 = vmatprep.subr.bf16.mxu0 0
    %1414 = vmatpush1.bf16.msra.mxu0 %v1367
    %1415 = vmatprep.subr.bf16.mxu0 0
    %1416 = vmatpush1.bf16.msra.mxu0 %v1368
    %1417 = vmatprep.subr.bf16.mxu0 0
    %1418 = vmatpush1.bf16.msra.mxu0 0
    %1419 = vmatprep.subr.bf16.mxu0 0
    %1420 = vmatpush1.bf16.msra.mxu0 0
    %1421 = vmatprep.subr.bf16.mxu0 0
    %1422 = vmatpush1.bf16.msra.mxu0 0
    %1423 = vmatprep.subr.bf16.mxu0 0
    %1424 = vmatpush1.bf16.msra.mxu0 0
    %1425 = vmatprep.subr.bf16.mxu0 0
    %1426 = vmatpush1.bf16.msra.mxu0 0
    %1427 = vmatprep.subr.bf16.mxu0 0
    %1428 = vmatpush1.bf16.msra.mxu0 0
    %1429 = vmatprep.subr.bf16.mxu0 0
    %1430 = vmatpush1.bf16.msra.mxu0 0
    %1431 = vmatprep.subr.bf16.mxu0 0
    %1432 = vmatpush1.bf16.msra.mxu0 0
    %1433 = vmatprep.subr.bf16.mxu0 0
    %1434 = vmatpush1.bf16.msra.mxu0 0
    %1435 = vmatprep.subr.bf16.mxu0 0
    %1436 = vmatpush1.bf16.msra.mxu0 0
    %1437 = vmatprep.subr.bf16.mxu0 0
    %1438 = vmatpush1.bf16.msra.mxu0 0
    %1439 = vmatprep.subr.bf16.mxu0 0
    %1440 = vmatpush1.bf16.msra.mxu0 0
    %1441 = vmatprep.subr.bf16.mxu0 0
    %1442 = vmatpush1.bf16.msra.mxu0 0
    %1443 = vmatprep.subr.bf16.mxu0 0
    %1444 = vmatpush1.bf16.msra.mxu0 0
    %1445 = vmatprep.mubr.bf16.mxu0 0
    %1446 = vmatmul.mubr.bf16.gmra.mrb[0].mxu0 %v1408
    %v1447 = vpop.f32.mrb[0].mxu0
    %v1448 = vadd.f32 %v1380, %v1447
    %v1449 = vpop.f32.mrb[0].mxu0
    %v1450 = vpop.f32.mrb[0].mxu0
    %v1451 = vadd.f32 %v1385, %v1450
    %v1452 = vpop.f32.mrb[0].mxu0
    %1453 = vmatprep.mubr.bf16.mxu0 0
    %1454 = vmatmul.mubr.bf16.gmra.mrb[0].mxu0 %v1411
    %v1455 = vpop.f32.mrb[0].mxu0
    %v1456 = vadd.f32 %v1390, %v1455
    %v1457 = vpop.f32.mrb[0].mxu0
    %v1458 = vpop.f32.mrb[0].mxu0
    %v1459 = vadd.f32 %v1395, %v1458
    %v1460 = vpop.f32.mrb[0].mxu0
    %1461 = vdwg.mxu0
    %v1462 = vpack.c.bf16 %v1451, %v1448
    %v1463 = vpack.c.bf16 %v1459, %v1456
    %v1466 = vunpack.c.l.b16 %v1462
    %v1467 = vunpack.c.h.b16 %v1462
    %v1468 = vunpack.c.l.b16 %v1463
    %v1469 = vunpack.c.h.b16 %v1463
    %v1470 = vpack.c.b16 %v1466, %v1466
    %v1471 = vpack.c.b16 %v1467, %v1467
    %v1472 = vpack.c.b16 %v1468, %v1468
    %v1473 = vpack.c.b16 %v1469, %v1469
    %1478 = vst [vmem:[#allocation2] sm:$0xf] %v1470
    %1479 = vst [vmem:[#allocation2 + $0x4] sm:$0xf] %v1471
    %1480 = vst [vmem:[#allocation2 + $0x8] sm:$0xf] %v1472
    %1481 = vst [vmem:[#allocation2 + $0xc] sm:$0xf] %v1473
    // Predicated region
    $region38: #{tpu_custom_call.1} parent=1 // pred_check
      _
    $region39: #{tpu_custom_call.1} parent=1 // pred_check_branch
      %1483 = sbr.rel (0) target = $region41
    $region40: #{tpu_custom_call.1} parent=1 // pred_region
      %s1485 = ssub.s32 256, 256
      %1486 = vsyncadd [#allocation3], %s1485
      %s1487 = sshll.u32 [#allocation2], 4
      %s1488 = int_to_ptr.vmem [resolvable:$true] %s1487
      %1493 = dma.vmem_to_hbm [thread:$0]  %s1488, 256, %s9, [#allocation3], 64, 64, 4
    $region41: #{tpu_custom_call.1} parent=1 // pred_fallthru
      _
    // Predicated region
    $region42: #{tpu_custom_call.1} parent=1 // pred_check
      _
    $region43: #{tpu_custom_call.1} parent=1 // pred_check_branch
      %1495 = sbr.rel (0) target = $region45
    $region44: #{tpu_custom_call.1} parent=1 // pred_region
      %1496 = dma.done [#allocation3], 256
    $region45: #{tpu_custom_call.1} parent=1 // pred_fallthru
      _
    %1497 = vsyncpa [#allocation3], 1

</llo_original>
